<compile_context>
chip_gen: v6e
topology: v6e:2x2x1
jax: 0.10.0
libtpu: 0.0.40
codegen_flags: <defaults>
</compile_context>

<pallas_src>
import functools
import math

import jax
import jax.numpy as jnp
from jax import lax
from jax.experimental import pallas as pl
from jax.experimental.pallas import tpu as pltpu

# ---------------- model sizes (small, consistent with the forward pass) ----------------
NFEAT = 32        # DefaultConfig.gcn_nfeat (must equal nhid because of linear5/linear6)
NHID = 32
NCLASS = 4
ROAD_NODES = 24
CELL_NODES = 40
BATCH = 8         # len(label_nids)
SEQ = 6           # cellular sequence length
DROPOUT = 0.5     # identity at inference


def _dot(a, b):
    # bf16 operands, f32 accumulation on the MXU; element-wise math stays f32.
    return jnp.dot(a.astype(jnp.bfloat16), b.astype(jnp.bfloat16),
                   preferred_element_type=jnp.float32)


# ---------------- the single fused Pallas kernel ----------------

def _fused_forward_kernel(mats_ref, headw_ref, bias_ref, idx_ref, dist_ref, out_ref,
                          *, n_road, n_cell, nhid, nclass, batch, seq_len, scale):
    H = nhid
    N = n_road + n_cell          # 64 ; also equals 2*H in this config
    f32 = jnp.float32

    # -------- static views of the packed parameter slabs (free) --------
    emb   = mats_ref[0 * N:1 * N, :]     # block-diag [road_emb ; cell_emb]      (N, 2F)
    w56   = mats_ref[1 * N:2 * N, :]     # block-diag [[W5,0],[0,W6]]            (2F, 2H)
    a_big = mats_ref[2 * N:3 * N, :]     # [[A_rr,A_rc],[A_cr,A_cc]]             (N, N)
    gw1   = mats_ref[3 * N:4 * N, :]     # [[W_rs,W_r2c],[W_c2r,W_cs]] layer 1   (2H, 2H)
    gw2   = mats_ref[4 * N:5 * N, :]     # layer 2                               (2H, 2H)

    b56 = bias_ref[0:1, :]               # [b5 | b6]
    gb1 = bias_ref[1:2, :]               # [b_rs1+b_c2r1 | b_r2c1+b_cs1]
    gb2 = bias_ref[2:3, :]
    b1  = bias_ref[3:4, 0:H]
    b7  = bias_ref[3:4, H:2 * H]
    b3  = bias_ref[4:5, 0:H]
    b4  = bias_ref[4:5, H:2 * H]
    b2p = bias_ref[5:6, 0:H]             # b2 padded with zeros to H lanes
    w3  = bias_ref[6:7, 0:H]             # linear3 weight (1 -> H), used as a row

    w1_full = headw_ref[0 * H:2 * H, :]  # [w1a ; w1b]  (2H, H)
    w7_full = headw_ref[2 * H:4 * H, :]  # [w7a ; w7b]
    w4      = headw_ref[4 * H:5 * H, :]
    w2_pad  = headw_ref[5 * H:6 * H, :]  # (H, H), only first nclass lanes meaningful

    # block-diag feature mask: road rows live in lanes [0,H), cellular rows in [H,2H)
    rows = lax.broadcasted_iota(jnp.int32, (N, 2 * H), 0)
    cols = lax.broadcasted_iota(jnp.int32, (N, 2 * H), 1)
    diag = (rows < n_road) == (cols < H)

    # -------- linear5 / linear6 as ONE block-diagonal matmul --------
    x0 = jnp.where(diag, _dot(emb, w56) + b56, 0.0)

    # -------- RGCN layer 1 (HeteroGraphConv sum over relations): 2 matmuls + relu -----
    x1 = jnp.where(diag, _dot(a_big, _dot(x0, gw1)) + gb1, 0.0)
    x1 = jnp.maximum(x1, 0.0)

    # -------- RGCN layer 2 (no relu); off-block garbage is never read downstream ------
    x2 = _dot(a_big, _dot(x1, gw2)) + gb2

    # -------- both index gathers as ONE in-kernel one-hot matmul --------
    n_gather = batch + batch * seq_len
    node_ids = lax.broadcasted_iota(jnp.int32, (n_gather, N), 1)
    onehot = (node_ids == idx_ref[...]).astype(f32)        # idx: (n_gather, 1) int32
    g = _dot(onehot, x2)                                    # (B + B*L, 2H)
    q  = g[0:batch, 0:H]                                    # road_picked_embedding (B,H)
    kv = g[batch:n_gather, H:2 * H]                         # cellular sequence   (B*L,H)

    # -------- scaled dot-product attention with per-batch block-diagonal mask --------
    scores = lax.dot_general(q.astype(jnp.bfloat16), kv.astype(jnp.bfloat16),
                             (((1,), (1,)), ((), ())),
                             preferred_element_type=f32) * scale        # (B, B*L)
    srow = lax.broadcasted_iota(jnp.int32, scores.shape, 0)
    scol = lax.broadcasted_iota(jnp.int32, scores.shape, 1)
    in_block = (scol >= srow * seq_len) & (scol < (srow + 1) * seq_len)
    smax = jnp.max(jnp.where(in_block, scores, -1e30), axis=-1, keepdims=True)
    p = jnp.where(in_block, jnp.exp(scores - smax), 0.0)
    attn = p * pl.reciprocal(jnp.sum(p, axis=-1, keepdims=True), approx=True)
    cell_hidden = _dot(attn, kv)                                        # (B, H)

    # -------- distance branch: linear3 (broadcast mul), relu, linear4, relu ----------
    d = jnp.maximum(dist_ref[...] * w3 + b3, 0.0)
    d = jnp.maximum(_dot(d, w4) + b4, 0.0)

    # -------- head: lane-concat + single matmuls (linear1, linear7, linear2) ---------
    o = jnp.maximum(_dot(jnp.concatenate([q, cell_hidden], axis=-1), w1_full) + b1, 0.0)
    o = jnp.maximum(_dot(jnp.concatenate([o, d], axis=-1), w7_full) + b7, 0.0)
    logits = (_dot(o, w2_pad) + b2p)[:, 0:nclass]
    logits = logits - jnp.max(logits, axis=-1, keepdims=True)
    e = jnp.exp(logits)
    out_ref[...] = (e / jnp.sum(e, axis=-1, keepdims=True)).astype(out_ref.dtype)


# ---------------- one-time parameter packing (off the hot path) ----------------

def pack_params(params, adj):
    R, C, H, F = ROAD_NODES, CELL_NODES, NHID, NFEAT
    assert F == H and R + C == 2 * H, "packing assumes nfeat == nhid and R+C == 2*nhid"
    f32 = jnp.float32

    def blockdiag(a, b):
        return jnp.block([[a, jnp.zeros((a.shape[0], b.shape[1]), f32)],
                          [jnp.zeros((b.shape[0], a.shape[1]), f32), b]])

    g1, g2 = params["rgcn1"], params["rgcn2"]
    emb_big = blockdiag(params["road_emb"], params["cell_emb"])                   # (64,64)
    w56_big = blockdiag(params["w5"], params["w6"])                               # (64,64)
    a_big = jnp.block([[adj["rr"], adj["rc"]], [adj["cr"], adj["cc"]]])           # (64,64)
    gw1 = jnp.block([[g1["road_self"]["w"], g1["road2cell"]["w"]],
                     [g1["cell2road"]["w"], g1["cell_self"]["w"]]])               # (64,64)
    gw2 = jnp.block([[g2["road_self"]["w"], g2["road2cell"]["w"]],
                     [g2["cell2road"]["w"], g2["cell_self"]["w"]]])               # (64,64)
    mats = jnp.concatenate([emb_big, w56_big, a_big, gw1, gw2], axis=0)           # (320,64)

    def padH(v):
        return jnp.concatenate([v, jnp.zeros((H - v.shape[0],), f32)])

    bias = jnp.stack([
        jnp.concatenate([params["b5"], params["b6"]]),
        jnp.concatenate([g1["road_self"]["b"] + g1["cell2road"]["b"],
                         g1["road2cell"]["b"] + g1["cell_self"]["b"]]),
        jnp.concatenate([g2["road_self"]["b"] + g2["cell2road"]["b"],
                         g2["road2cell"]["b"] + g2["cell_self"]["b"]]),
        jnp.concatenate([params["b1"], params["b7"]]),
        jnp.concatenate([params["b3"], params["b4"]]),
        jnp.concatenate([padH(params["b2"]), jnp.zeros((H,), f32)]),
        jnp.concatenate([params["w3"].reshape(-1), jnp.zeros((H,), f32)]),
        jnp.zeros((2 * H,), f32),
    ], axis=0)                                                                    # (8,64)

    w2_pad = jnp.concatenate([params["w2"], jnp.zeros((H, H - NCLASS), f32)], axis=1)
    headw = jnp.concatenate([
        jnp.concatenate([params["w1a"], params["w1b"]], axis=0),                  # (64,32)
        jnp.concatenate([params["w7a"], params["w7b"]], axis=0),                  # (64,32)
        params["w4"],                                                             # (32,32)
        w2_pad,                                                                   # (32,32)
    ], axis=0)                                                                    # (192,32)

    return {"mats": mats, "headw": headw, "bias": bias}


# ---------------- wrapper: one pallas_call for the whole forward ----------------

@jax.jit
def trans_model_forward(packed, cellular_id_lst, label_nids, node_distance):
    b = label_nids.shape[0]
    seq_len = cellular_id_lst.shape[1]

    # per-call data only: packed gather indices (cell ids offset past the road block)
    idx = jnp.concatenate([label_nids.astype(jnp.int32),
                           cellular_id_lst.reshape(-1).astype(jnp.int32) + ROAD_NODES]
                          ).reshape(-1, 1)                                        # (B+B*L,1)
    dist = node_distance.reshape(-1, 1).astype(jnp.float32)                       # (B,1)

    args = [packed["mats"], packed["headw"], packed["bias"], idx, dist]
    in_specs = [pl.BlockSpec(a.shape, lambda i, nd=a.ndim: (0,) * nd) for a in args]

    kernel = functools.partial(
        _fused_forward_kernel,
        n_road=ROAD_NODES, n_cell=CELL_NODES, nhid=NHID, nclass=NCLASS,
        batch=b, seq_len=seq_len, scale=1.0 / math.sqrt(NHID))

    return pl.pallas_call(
        kernel,
        grid=(1,),
        in_specs=in_specs,
        out_specs=pl.BlockSpec((b, NCLASS), lambda i: (0, 0)),
        out_shape=jax.ShapeDtypeStruct((b, NCLASS), jnp.float32),
        compiler_params=pltpu.CompilerParams(dimension_semantics=("arbitrary",)),
    )(*args)


# ---------------- graph / parameter setup (pure JAX glue, done once) ----------------

def normalize_adj(a):
    """GraphConv norm='both' on dense A[dst, src]; degrees clamped at 1 as in DGL."""
    deg_src = jnp.maximum(a.sum(axis=0), 1.0)
    deg_dst = jnp.maximum(a.sum(axis=1), 1.0)
    return (deg_dst[:, None] ** -0.5) * a * (deg_src[None, :] ** -0.5)


def init_params_and_graph(key):
    rels = {  # rel_name: (src_type, dst_type)
        "road_self": ("road", "road"),
        "cell2road": ("cellular", "road"),
        "road2cell": ("road", "cellular"),
        "cell_self": ("cellular", "cellular"),
    }
    n_nodes = {"road": ROAD_NODES, "cellular": CELL_NODES}
    keys = iter(jax.random.split(key, 64))

    def w(shape, scale=0.1):
        return (scale * jax.random.normal(next(keys), shape)).astype(jnp.float32)

    params = {
        "road_emb": w((ROAD_NODES, NFEAT), 1.0),
        "cell_emb": w((CELL_NODES, NFEAT), 1.0),
        "w5": w((NFEAT, NHID)), "b5": w((NHID,)),
        "w6": w((NFEAT, NHID)), "b6": w((NHID,)),
        # linear1 (2H -> H) stored split so the pair-concat becomes a weight stack
        "w1a": w((NHID, NHID)), "w1b": w((NHID, NHID)), "b1": w((NHID,)),
        "w2": w((NHID, NCLASS)), "b2": w((NCLASS,)),
        "w3": w((1, NHID)), "b3": w((NHID,)),
        "w4": w((NHID, NHID)), "b4": w((NHID,)),
        # linear7 (2H -> H) stored split
        "w7a": w((NHID, NHID)), "w7b": w((NHID, NHID)), "b7": w((NHID,)),
        "rgcn1": {r: {"w": w((NFEAT, NHID)), "b": w((NHID,))} for r in rels},
        "rgcn2": {r: {"w": w((NHID, NHID)), "b": w((NHID,))} for r in rels},
    }

    def adj_for(rel):
        src, dst = rels[rel]
        a = jax.random.bernoulli(next(keys), 0.25,
                                 (n_nodes[dst], n_nodes[src])).astype(jnp.float32)
        return normalize_adj(a)

    adj = {
        "rr": adj_for("road_self"),   # dst=road,     src=road
        "rc": adj_for("cell2road"),   # dst=road,     src=cellular
        "cr": adj_for("road2cell"),   # dst=cellular, src=road
        "cc": adj_for("cell_self"),   # dst=cellular, src=cellular
    }
    return params, adj


# ---------------- pure-JAX reference (same assumed semantics) for a sanity check -------

def reference_forward(params, adj, cellular_id_lst, label_nids, node_distance):
    road = params["road_emb"] @ params["w5"] + params["b5"]
    cell = params["cell_emb"] @ params["w6"] + params["b6"]

    def rgcn_layer(road_x, cell_x, lp):
        hr = (adj["rr"] @ (road_x @ lp["road_self"]["w"]) + lp["road_self"]["b"]
              + adj["rc"] @ (cell_x @ lp["cell2road"]["w"]) + lp["cell2road"]["b"])
        hc = (adj["cr"] @ (road_x @ lp["road2cell"]["w"]) + lp["road2cell"]["b"]
              + adj["cc"] @ (cell_x @ lp["cell_self"]["w"]) + lp["cell_self"]["b"])
        return hr, hc

    hr, hc = rgcn_layer(road, cell, params["rgcn1"])
    hr, hc = jax.nn.relu(hr), jax.nn.relu(hc)
    hr, hc = rgcn_layer(hr, hc, params["rgcn2"])

    q = hr[label_nids]                                  # [B, H]
    kv = hc[cellular_id_lst]                            # [B, L, H]
    scores = jnp.einsum("bh,blh->bl", q, kv) / math.sqrt(NHID)
    attn = jax.nn.softmax(scores, axis=-1)
    ch = jnp.einsum("bl,blh->bh", attn, kv)

    d = jax.nn.relu(node_distance.reshape(1, -1).T @ params["w3"] + params["b3"])
    d = jax.nn.relu(d @ params["w4"] + params["b4"])

    o = jax.nn.relu(q @ params["w1a"] + ch @ params["w1b"] + params["b1"])
    o = jax.nn.relu(o @ params["w7a"] + d @ params["w7b"] + params["b7"])
    logits = o @ params["w2"] + params["b2"]
    return jax.nn.softmax(logits, axis=1)


if __name__ == "__main__":
    key = jax.random.PRNGKey(0)
    k_param, k_ids, k_nids, k_dist = jax.random.split(key, 4)

    params, adj = init_params_and_graph(k_param)
    packed = pack_params(params, adj)   # one-time packing, off the per-call hot path

    dgl_cellular_id_lst = jax.random.randint(k_ids, (BATCH, SEQ), 0, CELL_NODES)
    label_nids = jax.random.randint(k_nids, (BATCH,), 0, ROAD_NODES)
    node_distance = jax.random.uniform(k_dist, (BATCH,), dtype=jnp.float32) * 100.0

    out = trans_model_forward(packed, dgl_cellular_id_lst, label_nids, node_distance)
    out = jax.block_until_ready(out)

    assert out.shape == (BATCH, NCLASS)
    assert bool(jnp.all(jnp.isfinite(out)))
    # softmax rows must sum to 1 (final softmax uses exact division)
    assert bool(jnp.allclose(out.sum(axis=1), 1.0, atol=1e-5))
    # agrees with the pure-JAX f32 reference (tolerance covers bf16 MXU operands)
    ref = reference_forward(params, adj, dgl_cellular_id_lst, label_nids, node_distance)
    assert bool(jnp.allclose(out, ref, atol=2e-2)), "kernel output diverges from JAX reference"

    print("KERNEL_OK")
</pallas_src>

<mosaic_0001>
module attributes {stable_mosaic.version = 11 : i64} {
  func.func @_fused_forward_kernel(%arg0: i32, %arg1: memref<320x64xf32, #tpu.memory_space<vmem>>, %arg2: memref<192x32xf32, #tpu.memory_space<vmem>>, %arg3: memref<8x64xf32, #tpu.memory_space<vmem>>, %arg4: memref<56x1xi32, #tpu.memory_space<vmem>>, %arg5: memref<8x1xf32, #tpu.memory_space<vmem>>, %arg6: memref<8x4xf32, #tpu.memory_space<vmem>>) attributes {dimension_semantics = [#tpu.dimension_semantics<arbitrary>], iteration_bounds = array<i64: 1>, scalar_prefetch = 0 : i64, scratch_operands = 0 : i64, tpu.core_type = #tpu.core_type<tc>, window_params = [{pipeline_mode = #tpu.pipeline_mode<synchronous>, transform_indices = @transform_0, window_bounds = array<i64: 320, 64>}, {pipeline_mode = #tpu.pipeline_mode<synchronous>, transform_indices = @transform_1, window_bounds = array<i64: 192, 32>}, {pipeline_mode = #tpu.pipeline_mode<synchronous>, transform_indices = @transform_2, window_bounds = array<i64: 8, 64>}, {pipeline_mode = #tpu.pipeline_mode<synchronous>, transform_indices = @transform_3, window_bounds = array<i64: 56, 1>}, {pipeline_mode = #tpu.pipeline_mode<synchronous>, transform_indices = @transform_4, window_bounds = array<i64: 8, 1>}, {pipeline_mode = #tpu.pipeline_mode<synchronous>, transform_indices = @transform_5, window_bounds = array<i64: 8, 4>}]} {
    %c0 = arith.constant 0 : index
    %c0_0 = arith.constant 0 : index
    %0 = vector.load %arg1[%c0, %c0_0] : memref<320x64xf32, #tpu.memory_space<vmem>>, vector<64x64xf32>
    %c64 = arith.constant 64 : index
    %c0_1 = arith.constant 0 : index
    %1 = vector.load %arg1[%c64, %c0_1] : memref<320x64xf32, #tpu.memory_space<vmem>>, vector<64x64xf32>
    %c128 = arith.constant 128 : index
    %c0_2 = arith.constant 0 : index
    %2 = vector.load %arg1[%c128, %c0_2] : memref<320x64xf32, #tpu.memory_space<vmem>>, vector<64x64xf32>
    %c192 = arith.constant 192 : index
    %c0_3 = arith.constant 0 : index
    %3 = vector.load %arg1[%c192, %c0_3] : memref<320x64xf32, #tpu.memory_space<vmem>>, vector<64x64xf32>
    %c256 = arith.constant 256 : index
    %c0_4 = arith.constant 0 : index
    %4 = vector.load %arg1[%c256, %c0_4] : memref<320x64xf32, #tpu.memory_space<vmem>>, vector<64x64xf32>
    %c0_5 = arith.constant 0 : index
    %c0_6 = arith.constant 0 : index
    %5 = vector.load %arg3[%c0_5, %c0_6] : memref<8x64xf32, #tpu.memory_space<vmem>>, vector<1x64xf32>
    %c1 = arith.constant 1 : index
    %c0_7 = arith.constant 0 : index
    %6 = vector.load %arg3[%c1, %c0_7] : memref<8x64xf32, #tpu.memory_space<vmem>>, vector<1x64xf32>
    %c2 = arith.constant 2 : index
    %c0_8 = arith.constant 0 : index
    %7 = vector.load %arg3[%c2, %c0_8] : memref<8x64xf32, #tpu.memory_space<vmem>>, vector<1x64xf32>
    %c3 = arith.constant 3 : index
    %c0_9 = arith.constant 0 : index
    %8 = vector.load %arg3[%c3, %c0_9] : memref<8x64xf32, #tpu.memory_space<vmem>>, vector<1x32xf32>
    %c3_10 = arith.constant 3 : index
    %c32 = arith.constant 32 : index
    %9 = vector.load %arg3[%c3_10, %c32] : memref<8x64xf32, #tpu.memory_space<vmem>>, vector<1x32xf32>
    %c4 = arith.constant 4 : index
    %c0_11 = arith.constant 0 : index
    %10 = vector.load %arg3[%c4, %c0_11] : memref<8x64xf32, #tpu.memory_space<vmem>>, vector<1x32xf32>
    %c4_12 = arith.constant 4 : index
    %c32_13 = arith.constant 32 : index
    %11 = vector.load %arg3[%c4_12, %c32_13] : memref<8x64xf32, #tpu.memory_space<vmem>>, vector<1x32xf32>
    %c5 = arith.constant 5 : index
    %c0_14 = arith.constant 0 : index
    %12 = vector.load %arg3[%c5, %c0_14] : memref<8x64xf32, #tpu.memory_space<vmem>>, vector<1x32xf32>
    %c6 = arith.constant 6 : index
    %c0_15 = arith.constant 0 : index
    %13 = vector.load %arg3[%c6, %c0_15] : memref<8x64xf32, #tpu.memory_space<vmem>>, vector<1x32xf32>
    %c0_16 = arith.constant 0 : index
    %c0_17 = arith.constant 0 : index
    %14 = vector.load %arg2[%c0_16, %c0_17] : memref<192x32xf32, #tpu.memory_space<vmem>>, vector<64x32xf32>
    %c64_18 = arith.constant 64 : index
    %c0_19 = arith.constant 0 : index
    %15 = vector.load %arg2[%c64_18, %c0_19] : memref<192x32xf32, #tpu.memory_space<vmem>>, vector<64x32xf32>
    %c128_20 = arith.constant 128 : index
    %c0_21 = arith.constant 0 : index
    %16 = vector.load %arg2[%c128_20, %c0_21] : memref<192x32xf32, #tpu.memory_space<vmem>>, vector<32x32xf32>
    %c160 = arith.constant 160 : index
    %c0_22 = arith.constant 0 : index
    %17 = vector.load %arg2[%c160, %c0_22] : memref<192x32xf32, #tpu.memory_space<vmem>>, vector<32x32xf32>
    %18 = tpu.iota {dimensions = array<i32: 0>} : vector<64x64xi32>
    %19 = tpu.iota {dimensions = array<i32: 1>} : vector<64x64xi32>
    %c24_i32 = arith.constant 24 : i32
    %20 = vector.broadcast %c24_i32 : i32 to vector<64x64xi32>
    %21 = arith.cmpi slt, %18, %20 : vector<64x64xi32>
    %c32_i32 = arith.constant 32 : i32
    %22 = vector.broadcast %c32_i32 : i32 to vector<64x64xi32>
    %23 = arith.cmpi slt, %19, %22 : vector<64x64xi32>
    %24 = arith.xori %21, %23 : vector<64x64xi1>
    %cst = arith.constant dense<true> : vector<64x64xi1>
    %25 = arith.xori %24, %cst : vector<64x64xi1>
    %26 = arith.truncf %0 : vector<64x64xf32> to vector<64x64xbf16>
    %27 = arith.truncf %1 : vector<64x64xf32> to vector<64x64xbf16>
    %cst_23 = arith.constant dense<0.000000e+00> : vector<64x64xf32>
    %28 = tpu.matmul %26, %27, %cst_23 {dimension_numbers = #tpu.dot_dimension_numbers<[1], [0], [0], [1], [0, 0, 1, 1], [], []>} : vector<64x64xbf16>, vector<64x64xbf16>, vector<64x64xf32> -> vector<64x64xf32>
    %29 = vector.broadcast %5 : vector<1x64xf32> to vector<64x64xf32>
    %30 = arith.addf %28, %29 : vector<64x64xf32>
    %cst_24 = arith.constant 0.000000e+00 : f32
    %31 = vector.broadcast %cst_24 : f32 to vector<64x64xf32>
    %32 = arith.select %25, %30, %31 : vector<64x64xi1>, vector<64x64xf32>
    %33 = arith.truncf %32 : vector<64x64xf32> to vector<64x64xbf16>
    %34 = arith.truncf %3 : vector<64x64xf32> to vector<64x64xbf16>
    %cst_25 = arith.constant dense<0.000000e+00> : vector<64x64xf32>
    %35 = tpu.matmul %33, %34, %cst_25 {dimension_numbers = #tpu.dot_dimension_numbers<[1], [0], [0], [1], [0, 0, 1, 1], [], []>} : vector<64x64xbf16>, vector<64x64xbf16>, vector<64x64xf32> -> vector<64x64xf32>
    %36 = arith.truncf %2 : vector<64x64xf32> to vector<64x64xbf16>
    %37 = arith.truncf %35 : vector<64x64xf32> to vector<64x64xbf16>
    %cst_26 = arith.constant dense<0.000000e+00> : vector<64x64xf32>
    %38 = tpu.matmul %36, %37, %cst_26 {dimension_numbers = #tpu.dot_dimension_numbers<[1], [0], [0], [1], [0, 0, 1, 1], [], []>} : vector<64x64xbf16>, vector<64x64xbf16>, vector<64x64xf32> -> vector<64x64xf32>
    %39 = vector.broadcast %6 : vector<1x64xf32> to vector<64x64xf32>
    %40 = arith.addf %38, %39 : vector<64x64xf32>
    %cst_27 = arith.constant 0.000000e+00 : f32
    %41 = vector.broadcast %cst_27 : f32 to vector<64x64xf32>
    %42 = arith.select %25, %40, %41 : vector<64x64xi1>, vector<64x64xf32>
    %cst_28 = arith.constant 0.000000e+00 : f32
    %43 = vector.broadcast %cst_28 : f32 to vector<64x64xf32>
    %44 = arith.maximumf %42, %43 : vector<64x64xf32>
    %45 = arith.truncf %44 : vector<64x64xf32> to vector<64x64xbf16>
    %46 = arith.truncf %4 : vector<64x64xf32> to vector<64x64xbf16>
    %cst_29 = arith.constant dense<0.000000e+00> : vector<64x64xf32>
    %47 = tpu.matmul %45, %46, %cst_29 {dimension_numbers = #tpu.dot_dimension_numbers<[1], [0], [0], [1], [0, 0, 1, 1], [], []>} : vector<64x64xbf16>, vector<64x64xbf16>, vector<64x64xf32> -> vector<64x64xf32>
    %48 = arith.truncf %2 : vector<64x64xf32> to vector<64x64xbf16>
    %49 = arith.truncf %47 : vector<64x64xf32> to vector<64x64xbf16>
    %cst_30 = arith.constant dense<0.000000e+00> : vector<64x64xf32>
    %50 = tpu.matmul %48, %49, %cst_30 {dimension_numbers = #tpu.dot_dimension_numbers<[1], [0], [0], [1], [0, 0, 1, 1], [], []>} : vector<64x64xbf16>, vector<64x64xbf16>, vector<64x64xf32> -> vector<64x64xf32>
    %51 = vector.broadcast %7 : vector<1x64xf32> to vector<64x64xf32>
    %52 = arith.addf %50, %51 : vector<64x64xf32>
    %53 = tpu.iota {dimensions = array<i32: 1>} : vector<56x64xi32>
    %c0_31 = arith.constant 0 : index
    %c0_32 = arith.constant 0 : index
    %54 = vector.load %arg4[%c0_31, %c0_32] : memref<56x1xi32, #tpu.memory_space<vmem>>, vector<56x1xi32>
    %55 = vector.broadcast %54 : vector<56x1xi32> to vector<56x64xi32>
    %56 = arith.cmpi eq, %53, %55 : vector<56x64xi32>
    %57 = arith.extui %56 : vector<56x64xi1> to vector<56x64xi32>
    %58 = arith.sitofp %57 : vector<56x64xi32> to vector<56x64xf32>
    %59 = arith.truncf %58 : vector<56x64xf32> to vector<56x64xbf16>
    %60 = arith.truncf %52 : vector<64x64xf32> to vector<64x64xbf16>
    %cst_33 = arith.constant dense<0.000000e+00> : vector<56x64xf32>
    %61 = tpu.matmul %59, %60, %cst_33 {dimension_numbers = #tpu.dot_dimension_numbers<[1], [0], [0], [1], [0, 0, 1, 1], [], []>} : vector<56x64xbf16>, vector<64x64xbf16>, vector<56x64xf32> -> vector<56x64xf32>
    %62 = vector.extract_strided_slice %61 {offsets = [0, 0], sizes = [8, 32], strides = [1, 1]} : vector<56x64xf32> to vector<8x32xf32>
    %63 = vector.extract_strided_slice %61 {offsets = [8, 32], sizes = [48, 32], strides = [1, 1]} : vector<56x64xf32> to vector<48x32xf32>
    %64 = arith.truncf %62 : vector<8x32xf32> to vector<8x32xbf16>
    %65 = arith.truncf %63 : vector<48x32xf32> to vector<48x32xbf16>
    %cst_34 = arith.constant dense<0.000000e+00> : vector<8x48xf32>
    %66 = tpu.matmul %64, %65, %cst_34 {dimension_numbers = #tpu.dot_dimension_numbers<[1], [1], [0], [0], [0, 0, 1, 0], [], []>} : vector<8x32xbf16>, vector<48x32xbf16>, vector<8x48xf32> -> vector<8x48xf32>
    %cst_35 = arith.constant 0.176776692 : f32
    %67 = vector.broadcast %cst_35 : f32 to vector<8x48xf32>
    %68 = arith.mulf %66, %67 : vector<8x48xf32>
    %69 = tpu.iota {dimensions = array<i32: 0>} : vector<8x48xi32>
    %70 = tpu.iota {dimensions = array<i32: 1>} : vector<8x48xi32>
    %c6_i32 = arith.constant 6 : i32
    %71 = vector.broadcast %c6_i32 : i32 to vector<8x48xi32>
    %72 = arith.muli %69, %71 : vector<8x48xi32>
    %73 = arith.cmpi sge, %70, %72 : vector<8x48xi32>
    %c1_i32 = arith.constant 1 : i32
    %74 = vector.broadcast %c1_i32 : i32 to vector<8x48xi32>
    %75 = arith.addi %69, %74 : vector<8x48xi32>
    %c6_i32_36 = arith.constant 6 : i32
    %76 = vector.broadcast %c6_i32_36 : i32 to vector<8x48xi32>
    %77 = arith.muli %75, %76 : vector<8x48xi32>
    %78 = arith.cmpi slt, %70, %77 : vector<8x48xi32>
    %79 = arith.andi %73, %78 : vector<8x48xi1>
    %cst_37 = arith.constant -1.000000e+30 : f32
    %80 = vector.broadcast %cst_37 : f32 to vector<8x48xf32>
    %81 = arith.select %79, %68, %80 : vector<8x48xi1>, vector<8x48xf32>
    %cst_38 = arith.constant dense<0xFF800000> : vector<8xf32>
    %82 = vector.multi_reduction <maximumf>, %81, %cst_38 [1] : vector<8x48xf32> to vector<8xf32>
    %83 = vector.shape_cast %82 : vector<8xf32> to vector<8x1xf32>
    %84 = vector.broadcast %83 : vector<8x1xf32> to vector<8x48xf32>
    %85 = arith.subf %68, %84 : vector<8x48xf32>
    %86 = math.exp %85 : vector<8x48xf32>
    %cst_39 = arith.constant 0.000000e+00 : f32
    %87 = vector.broadcast %cst_39 : f32 to vector<8x48xf32>
    %88 = arith.select %79, %86, %87 : vector<8x48xi1>, vector<8x48xf32>
    %cst_40 = arith.constant dense<0.000000e+00> : vector<8xf32>
    %89 = vector.multi_reduction <add>, %88, %cst_40 [1] : vector<8x48xf32> to vector<8xf32>
    %90 = vector.shape_cast %89 : vector<8xf32> to vector<8x1xf32>
    %91 = tpu.reciprocal %90 {approx = true} : vector<8x1xf32> -> vector<8x1xf32>
    %92 = vector.broadcast %91 : vector<8x1xf32> to vector<8x48xf32>
    %93 = arith.mulf %88, %92 : vector<8x48xf32>
    %94 = arith.truncf %93 : vector<8x48xf32> to vector<8x48xbf16>
    %95 = arith.truncf %63 : vector<48x32xf32> to vector<48x32xbf16>
    %cst_41 = arith.constant dense<0.000000e+00> : vector<8x32xf32>
    %96 = tpu.matmul %94, %95, %cst_41 {dimension_numbers = #tpu.dot_dimension_numbers<[1], [0], [0], [1], [0, 0, 1, 1], [], []>} : vector<8x48xbf16>, vector<48x32xbf16>, vector<8x32xf32> -> vector<8x32xf32>
    %c0_42 = arith.constant 0 : index
    %c0_43 = arith.constant 0 : index
    %97 = vector.load %arg5[%c0_42, %c0_43] : memref<8x1xf32, #tpu.memory_space<vmem>>, vector<8x1xf32>
    %98 = vector.broadcast %97 : vector<8x1xf32> to vector<8x32xf32>
    %99 = vector.broadcast %13 : vector<1x32xf32> to vector<8x32xf32>
    %100 = arith.mulf %98, %99 : vector<8x32xf32>
    %101 = vector.broadcast %10 : vector<1x32xf32> to vector<8x32xf32>
    %102 = arith.addf %100, %101 : vector<8x32xf32>
    %cst_44 = arith.constant 0.000000e+00 : f32
    %103 = vector.broadcast %cst_44 : f32 to vector<8x32xf32>
    %104 = arith.maximumf %102, %103 : vector<8x32xf32>
    %105 = arith.truncf %104 : vector<8x32xf32> to vector<8x32xbf16>
    %106 = arith.truncf %16 : vector<32x32xf32> to vector<32x32xbf16>
    %cst_45 = arith.constant dense<0.000000e+00> : vector<8x32xf32>
    %107 = tpu.matmul %105, %106, %cst_45 {dimension_numbers = #tpu.dot_dimension_numbers<[1], [0], [0], [1], [0, 0, 1, 1], [], []>} : vector<8x32xbf16>, vector<32x32xbf16>, vector<8x32xf32> -> vector<8x32xf32>
    %108 = vector.broadcast %11 : vector<1x32xf32> to vector<8x32xf32>
    %109 = arith.addf %107, %108 : vector<8x32xf32>
    %cst_46 = arith.constant 0.000000e+00 : f32
    %110 = vector.broadcast %cst_46 : f32 to vector<8x32xf32>
    %111 = arith.maximumf %109, %110 : vector<8x32xf32>
    %112 = tpu.concatenate %62, %96 in 1 : vector<8x32xf32>, vector<8x32xf32> -> vector<8x64xf32>
    %113 = arith.truncf %112 : vector<8x64xf32> to vector<8x64xbf16>
    %114 = arith.truncf %14 : vector<64x32xf32> to vector<64x32xbf16>
    %cst_47 = arith.constant dense<0.000000e+00> : vector<8x32xf32>
    %115 = tpu.matmul %113, %114, %cst_47 {dimension_numbers = #tpu.dot_dimension_numbers<[1], [0], [0], [1], [0, 0, 1, 1], [], []>} : vector<8x64xbf16>, vector<64x32xbf16>, vector<8x32xf32> -> vector<8x32xf32>
    %116 = vector.broadcast %8 : vector<1x32xf32> to vector<8x32xf32>
    %117 = arith.addf %115, %116 : vector<8x32xf32>
    %cst_48 = arith.constant 0.000000e+00 : f32
    %118 = vector.broadcast %cst_48 : f32 to vector<8x32xf32>
    %119 = arith.maximumf %117, %118 : vector<8x32xf32>
    %120 = tpu.concatenate %119, %111 in 1 : vector<8x32xf32>, vector<8x32xf32> -> vector<8x64xf32>
    %121 = arith.truncf %120 : vector<8x64xf32> to vector<8x64xbf16>
    %122 = arith.truncf %15 : vector<64x32xf32> to vector<64x32xbf16>
    %cst_49 = arith.constant dense<0.000000e+00> : vector<8x32xf32>
    %123 = tpu.matmul %121, %122, %cst_49 {dimension_numbers = #tpu.dot_dimension_numbers<[1], [0], [0], [1], [0, 0, 1, 1], [], []>} : vector<8x64xbf16>, vector<64x32xbf16>, vector<8x32xf32> -> vector<8x32xf32>
    %124 = vector.broadcast %9 : vector<1x32xf32> to vector<8x32xf32>
    %125 = arith.addf %123, %124 : vector<8x32xf32>
    %cst_50 = arith.constant 0.000000e+00 : f32
    %126 = vector.broadcast %cst_50 : f32 to vector<8x32xf32>
    %127 = arith.maximumf %125, %126 : vector<8x32xf32>
    %128 = arith.truncf %127 : vector<8x32xf32> to vector<8x32xbf16>
    %129 = arith.truncf %17 : vector<32x32xf32> to vector<32x32xbf16>
    %cst_51 = arith.constant dense<0.000000e+00> : vector<8x32xf32>
    %130 = tpu.matmul %128, %129, %cst_51 {dimension_numbers = #tpu.dot_dimension_numbers<[1], [0], [0], [1], [0, 0, 1, 1], [], []>} : vector<8x32xbf16>, vector<32x32xbf16>, vector<8x32xf32> -> vector<8x32xf32>
    %131 = vector.broadcast %12 : vector<1x32xf32> to vector<8x32xf32>
    %132 = arith.addf %130, %131 : vector<8x32xf32>
    %133 = vector.extract_strided_slice %132 {offsets = [0, 0], sizes = [8, 4], strides = [1, 1]} : vector<8x32xf32> to vector<8x4xf32>
    %cst_52 = arith.constant dense<0xFF800000> : vector<8xf32>
    %134 = vector.multi_reduction <maximumf>, %133, %cst_52 [1] : vector<8x4xf32> to vector<8xf32>
    %135 = vector.shape_cast %134 : vector<8xf32> to vector<8x1xf32>
    %136 = vector.broadcast %135 : vector<8x1xf32> to vector<8x4xf32>
    %137 = arith.subf %133, %136 : vector<8x4xf32>
    %138 = math.exp %137 : vector<8x4xf32>
    %cst_53 = arith.constant dense<0.000000e+00> : vector<8xf32>
    %139 = vector.multi_reduction <add>, %138, %cst_53 [1] : vector<8x4xf32> to vector<8xf32>
    %140 = vector.shape_cast %139 : vector<8xf32> to vector<8x1xf32>
    %141 = vector.broadcast %140 : vector<8x1xf32> to vector<8x4xf32>
    %142 = arith.divf %138, %141 : vector<8x4xf32>
    %c0_54 = arith.constant 0 : index
    %c0_55 = arith.constant 0 : index
    %143 = vector.load %arg6[%c0_54, %c0_55] : memref<8x4xf32, #tpu.memory_space<vmem>>, vector<8x4xf32>
    tpu.vector_store %arg6[%c0_54, %c0_55], %142 {strides = array<i32>} : memref<8x4xf32, #tpu.memory_space<vmem>>, vector<8x4xf32>,
    return
  }
  func.func @transform_0(%arg0: i32) -> (i32, i32) {
    %c0_i32 = arith.constant 0 : i32
    %c0_i32_0 = arith.constant 0 : i32
    %c0_i32_1 = arith.constant 0 : i32
    return %c0_i32, %c0_i32_0 : i32, i32
  }
  func.func @transform_1(%arg0: i32) -> (i32, i32) {
    %c0_i32 = arith.constant 0 : i32
    %c0_i32_0 = arith.constant 0 : i32
    %c0_i32_1 = arith.constant 0 : i32
    return %c0_i32, %c0_i32_0 : i32, i32
  }
  func.func @transform_2(%arg0: i32) -> (i32, i32) {
    %c0_i32 = arith.constant 0 : i32
    %c0_i32_0 = arith.constant 0 : i32
    %c0_i32_1 = arith.constant 0 : i32
    return %c0_i32, %c0_i32_0 : i32, i32
  }
  func.func @transform_3(%arg0: i32) -> (i32, i32) {
    %c0_i32 = arith.constant 0 : i32
    %c0_i32_0 = arith.constant 0 : i32
    %c0_i32_1 = arith.constant 0 : i32
    return %c0_i32, %c0_i32_0 : i32, i32
  }
  func.func @transform_4(%arg0: i32) -> (i32, i32) {
    %c0_i32 = arith.constant 0 : i32
    %c0_i32_0 = arith.constant 0 : i32
    %c0_i32_1 = arith.constant 0 : i32
    return %c0_i32, %c0_i32_0 : i32, i32
  }
  func.func @transform_5(%arg0: i32) -> (i32, i32) {
    %c0_i32 = arith.constant 0 : i32
    %c0_i32_0 = arith.constant 0 : i32
    %c0_i32_1 = arith.constant 0 : i32
    return %c0_i32, %c0_i32_0 : i32, i32
  }
}

</mosaic_0001>

<llo_original>
// kernel: trans_model_forward.1
$region0: #{trans_model_forward.1}
  #allocation0 [shape = 'u32[]', space=smem, size = 0x4, offset = 0x4, fixed_abs, tag = 'smem constant byte address 0x4 - core index']
  #allocation1 [shape = 'u32[144,128]{1,0:T(1,128)}', space=vmem, size = 0x12000, scoped, tag = 'internal scratch']
  %s0 = inlined_call_operand.vmem [shape: f32[320,64], index: 0, kind: input, shape index: {}]
  %s1 = inlined_call_operand.vmem [shape: f32[192,32], index: 1, kind: input, shape index: {}]
  %s2 = inlined_call_operand.vmem [shape: f32[8,64], index: 2, kind: input, shape index: {}]
  %s3 = inlined_call_operand.vmem [shape: s32[56,1], index: 3, kind: input, shape index: {}]
  %s4 = inlined_call_operand.vmem [shape: f32[8,1], index: 4, kind: input, shape index: {}]
  %s5 = inlined_call_operand.vmem [shape: f32[8,4], index: 5, kind: output, shape index: {}]
  %s6 = sld [smem:[#allocation0]]
  $region30: #{trans_model_forward.1} parent=0
    _
  %s8 = ssub.s32 1, %s6
  %s9 = scalar_select 0, %s8, %s6
  // Predicated region
  $region2: #{trans_model_forward.1} parent=0 // pred_check
    _
  $region3: #{trans_model_forward.1} parent=0 // pred_check_branch
    %11 = sbr.rel (0) target = $region5
  $region4: #{trans_model_forward.1} parent=0 // pred_region
    _
  $region5: #{trans_model_forward.1} parent=0 // pred_fallthru
    _
  // Predicated region
  $region6: #{trans_model_forward.1} parent=0 // pred_check
    _
  $region7: #{trans_model_forward.1} parent=0 // pred_check_branch
    %13 = sbr.rel (0) target = $region9
  $region8: #{trans_model_forward.1} parent=0 // pred_region
    _
  $region9: #{trans_model_forward.1} parent=0 // pred_fallthru
    _
  // Predicated region
  $region10: #{trans_model_forward.1} parent=0 // pred_check
    _
  $region11: #{trans_model_forward.1} parent=0 // pred_check_branch
    %15 = sbr.rel (0) target = $region13
  $region12: #{trans_model_forward.1} parent=0 // pred_region
    _
  $region13: #{trans_model_forward.1} parent=0 // pred_fallthru
    _
  // Predicated region
  $region14: #{trans_model_forward.1} parent=0 // pred_check
    _
  $region15: #{trans_model_forward.1} parent=0 // pred_check_branch
    %17 = sbr.rel (0) target = $region17
  $region16: #{trans_model_forward.1} parent=0 // pred_region
    _
  $region17: #{trans_model_forward.1} parent=0 // pred_fallthru
    _
  // Predicated region
  $region18: #{trans_model_forward.1} parent=0 // pred_check
    _
  $region19: #{trans_model_forward.1} parent=0 // pred_check_branch
    %19 = sbr.rel (0) target = $region21
  $region20: #{trans_model_forward.1} parent=0 // pred_region
    _
  $region21: #{trans_model_forward.1} parent=0 // pred_fallthru
    _
  %v21 = vld [vmem:[%s0] sm:$0xff]
  %v22 = vld [vmem:[%s0 + $0x8] sm:$0xff]
  %v23 = vld [vmem:[%s0 + $0x10] sm:$0xff]
  %v24 = vld [vmem:[%s0 + $0x18] sm:$0xff]
  %v25 = vld [vmem:[%s0 + $0x20] sm:$0xff]
  %v26 = vld [vmem:[%s0 + $0x28] sm:$0xff]
  %v27 = vld [vmem:[%s0 + $0x30] sm:$0xff]
  %v28 = vld [vmem:[%s0 + $0x38] sm:$0xff]
  %v29 = vld [vmem:[%s0 + $0x40] sm:$0xff]
  %v30 = vld [vmem:[%s0 + $0x48] sm:$0xff]
  %v31 = vld [vmem:[%s0 + $0x50] sm:$0xff]
  %v32 = vld [vmem:[%s0 + $0x58] sm:$0xff]
  %v33 = vld [vmem:[%s0 + $0x60] sm:$0xff]
  %v34 = vld [vmem:[%s0 + $0x68] sm:$0xff]
  %v35 = vld [vmem:[%s0 + $0x70] sm:$0xff]
  %v36 = vld [vmem:[%s0 + $0x78] sm:$0xff]
  %v37 = vld [vmem:[%s0 + $0x80] sm:$0xff]
  %v38 = vld [vmem:[%s0 + $0x88] sm:$0xff]
  %v39 = vld [vmem:[%s0 + $0x90] sm:$0xff]
  %v40 = vld [vmem:[%s0 + $0x98] sm:$0xff]
  %v41 = vld [vmem:[%s0 + $0xa0] sm:$0xff]
  %v42 = vld [vmem:[%s0 + $0xa8] sm:$0xff]
  %v43 = vld [vmem:[%s0 + $0xb0] sm:$0xff]
  %v44 = vld [vmem:[%s0 + $0xb8] sm:$0xff]
  %v45 = vld [vmem:[%s0 + $0xc0] sm:$0xff]
  %v46 = vld [vmem:[%s0 + $0xc8] sm:$0xff]
  %v47 = vld [vmem:[%s0 + $0xd0] sm:$0xff]
  %v48 = vld [vmem:[%s0 + $0xd8] sm:$0xff]
  %v49 = vld [vmem:[%s0 + $0xe0] sm:$0xff]
  %v50 = vld [vmem:[%s0 + $0xe8] sm:$0xff]
  %v51 = vld [vmem:[%s0 + $0xf0] sm:$0xff]
  %v52 = vld [vmem:[%s0 + $0xf8] sm:$0xff]
  %v53 = vld [vmem:[%s0 + $0x100] sm:$0xff]
  %v54 = vld [vmem:[%s0 + $0x108] sm:$0xff]
  %v55 = vld [vmem:[%s0 + $0x110] sm:$0xff]
  %v56 = vld [vmem:[%s0 + $0x118] sm:$0xff]
  %v57 = vld [vmem:[%s0 + $0x120] sm:$0xff]
  %v58 = vld [vmem:[%s0 + $0x128] sm:$0xff]
  %v59 = vld [vmem:[%s0 + $0x130] sm:$0xff]
  %v60 = vld [vmem:[%s0 + $0x138] sm:$0xff]
  %v61 = vld [vmem:[%s2] sm:$0x1]
  %v62 = vld [vmem:[%s2 + $0x1] sm:$0x1]
  %v63 = vld [vmem:[%s2 + $0x2] sm:$0x1]
  %v64 = vld [vmem:[%s2 + $0x3] sm:$0x1]
  %v65 = vld [vmem:[%s2 + $0x4] sm:$0x1]
  %v66 = vld [vmem:[%s2 + $0x5] sm:$0x1]
  %v67 = vld [vmem:[%s2 + $0x6] sm:$0x1]
  %v68 = vld [vmem:[%s1] sm:$0xff]
  %v69 = vld [vmem:[%s1 + $0x8] sm:$0xff]
  %v70 = vld [vmem:[%s1 + $0x10] sm:$0xff]
  %v71 = vld [vmem:[%s1 + $0x18] sm:$0xff]
  %v72 = vld [vmem:[%s1 + $0x20] sm:$0xff]
  %v73 = vld [vmem:[%s1 + $0x28] sm:$0xff]
  %v74 = vld [vmem:[%s1 + $0x30] sm:$0xff]
  %v75 = vld [vmem:[%s1 + $0x38] sm:$0xff]
  %v76 = vld [vmem:[%s1 + $0x40] sm:$0xff]
  %v77 = vld [vmem:[%s1 + $0x48] sm:$0xff]
  %v78 = vld [vmem:[%s1 + $0x50] sm:$0xff]
  %v79 = vld [vmem:[%s1 + $0x58] sm:$0xff]
  %v80 = vld [vmem:[%s1 + $0x60] sm:$0xff]
  %v81 = vld [vmem:[%s1 + $0x68] sm:$0xff]
  %v82 = vld [vmem:[%s1 + $0x70] sm:$0xff]
  %v83 = vld [vmem:[%s1 + $0x78] sm:$0xff]
  %v84 = vld [vmem:[%s1 + $0x80] sm:$0xff]
  %v85 = vld [vmem:[%s1 + $0x88] sm:$0xff]
  %v86 = vld [vmem:[%s1 + $0x90] sm:$0xff]
  %v87 = vld [vmem:[%s1 + $0x98] sm:$0xff]
  %v88 = vld [vmem:[%s1 + $0xa0] sm:$0xff]
  %v89 = vld [vmem:[%s1 + $0xa8] sm:$0xff]
  %v90 = vld [vmem:[%s1 + $0xb0] sm:$0xff]
  %v91 = vld [vmem:[%s1 + $0xb8] sm:$0xff]
  %v92 = vlaneseq
  %v93 = vshrl.u32 %v92, 7
  %v94 = vadd.s32 %v93, 8
  %v95 = vadd.s32 %v93, 16
  %v96 = vadd.s32 %v93, 24
  %v97 = vadd.s32 %v93, 32
  %v98 = vadd.s32 %v93, 40
  %v99 = vadd.s32 %v93, 48
  %v100 = vadd.s32 %v93, 56
  %v101 = vlaneseq
  %v102 = vand.u32 %v101, 127
  %vm103 = vcmp.lt.s32.totalorder %v93, 24
  %vm104 = vcmp.lt.s32.totalorder %v94, 24
  %vm105 = vcmp.lt.s32.totalorder %v95, 24
  %vm106 = vcmp.lt.s32.totalorder %v96, 24
  %vm107 = vcmp.lt.s32.totalorder %v97, 24
  %vm108 = vcmp.lt.s32.totalorder %v98, 24
  %vm109 = vcmp.lt.s32.totalorder %v99, 24
  %vm110 = vcmp.lt.s32.totalorder %v100, 24
  %vm111 = vcmp.lt.s32.totalorder %v102, 32
  %vm112 = vmxor %vm103, %vm111
  %vm113 = vmxor %vm104, %vm111
  %vm114 = vmxor %vm105, %vm111
  %vm115 = vmxor %vm106, %vm111
  %vm116 = vmxor %vm107, %vm111
  %vm117 = vmxor %vm108, %vm111
  %vm118 = vmxor %vm109, %vm111
  %vm119 = vmxor %vm110, %vm111
  %vm120 = vmxor %vm112, 1
  %vm121 = vmxor %vm113, 1
  %vm122 = vmxor %vm114, 1
  %vm123 = vmxor %vm115, 1
  %vm124 = vmxor %vm116, 1
  %vm125 = vmxor %vm117, 1
  %vm126 = vmxor %vm118, 1
  %vm127 = vmxor %vm119, 1
  %v128 = vpack.c.bf16 %v22, %v21
  %v129 = vpack.c.bf16 %v24, %v23
  %v130 = vpack.c.bf16 %v26, %v25
  %v131 = vpack.c.bf16 %v28, %v27
  %v132 = vpack.c.bf16 %v30, %v29
  %v133 = vpack.c.bf16 %v32, %v31
  %v134 = vpack.c.bf16 %v34, %v33
  %v135 = vpack.c.bf16 %v36, %v35
  %v136 = vlaneseq
  %v137 = vshrl.u32 %v136, 7
  %v138 = vsub.s32 0, %v137
  %v139 = vrot.slane %v61, %v138
  %vm140 = vcmask 523264
  %v142 = vsel %vm140, %v128, 0
  %v145 = vsel %vm140, %v129, 0
  %v148 = vsel %vm140, %v130, 0
  %v151 = vsel %vm140, %v131, 0
  %153 = vmatprep.subr.bf16.mxu0 0
  %154 = vmatpush1.bf16.msra.mxu0 0
  %155 = vmatprep.subr.bf16.mxu0 0
  %156 = vmatpush1.bf16.msra.mxu0 0
  %157 = vmatprep.subr.bf16.mxu0 0
  %158 = vmatpush1.bf16.msra.mxu0 0
  %159 = vmatprep.subr.bf16.mxu0 0
  %160 = vmatpush1.bf16.msra.mxu0 0
  %161 = vmatprep.subr.bf16.mxu0 0
  %162 = vmatpush1.bf16.msra.mxu0 %v135
  %163 = vmatprep.subr.bf16.mxu0 0
  %164 = vmatpush1.bf16.msra.mxu0 %v134
  %165 = vmatprep.subr.bf16.mxu0 0
  %166 = vmatpush1.bf16.msra.mxu0 %v133
  %167 = vmatprep.subr.bf16.mxu0 0
  %168 = vmatpush1.bf16.msra.mxu0 %v132
  %169 = vmatprep.subr.bf16.mxu0 0
  %170 = vmatpush2.bf16.msra.mxu0 0
  %171 = vmatprep.subr.bf16.mxu0 0
  %172 = vmatpush2.bf16.msra.mxu0 0
  %173 = vmatprep.subr.bf16.mxu0 0
  %174 = vmatpush2.bf16.msra.mxu0 0
  %175 = vmatprep.subr.bf16.mxu0 0
  %176 = vmatpush2.bf16.msra.mxu0 0
  %177 = vmatprep.subr.bf16.mxu0 0
  %178 = vmatpush2.bf16.msra.mxu0 0
  %179 = vmatprep.subr.bf16.mxu0 0
  %180 = vmatpush2.bf16.msra.mxu0 0
  %181 = vmatprep.subr.bf16.mxu0 0
  %182 = vmatpush2.bf16.msra.mxu0 0
  %183 = vmatprep.subr.bf16.mxu0 0
  %184 = vmatpush2.bf16.msra.mxu0 0
  %185 = vmatprep.mubr.bf16.mxu0 0
  %186 = vmatmul.mubr.bf16.gmra.mxu0 %v142
  %v187 = vpop.f32.mrf.mxu0
  %v188 = vadd.f32 %v139, %v187
  %v189 = vpop.f32.mrf.mxu0
  %v190 = vpop.f32.mrf.mxu0
  %v191 = vadd.f32 %v139, %v190
  %v192 = vpop.f32.mrf.mxu0
  %193 = vmatprep.mubr.bf16.mxu0 0
  %194 = vmatmul.mubr.bf16.gmra.mxu0 %v145
  %v195 = vpop.f32.mrf.mxu0
  %v196 = vadd.f32 %v139, %v195
  %v197 = vpop.f32.mrf.mxu0
  %v198 = vpop.f32.mrf.mxu0
  %v199 = vadd.f32 %v139, %v198
  %v200 = vpop.f32.mrf.mxu0
  %201 = vmatprep.mubr.bf16.mxu0 0
  %202 = vmatmul.mubr.bf16.gmra.mxu0 %v148
  %v203 = vpop.f32.mrf.mxu0
  %v204 = vadd.f32 %v139, %v203
  %v205 = vpop.f32.mrf.mxu0
  %v206 = vpop.f32.mrf.mxu0
  %v207 = vadd.f32 %v139, %v206
  %v208 = vpop.f32.mrf.mxu0
  %209 = vmatprep.mubr.bf16.mxu0 0
  %210 = vmatmul.mubr.bf16.gmra.mxu0 %v151
  %v211 = vpop.f32.mrf.mxu0
  %v212 = vadd.f32 %v139, %v211
  %v213 = vpop.f32.mrf.mxu0
  %v214 = vpop.f32.mrf.mxu0
  %v215 = vadd.f32 %v139, %v214
  %v216 = vpop.f32.mrf.mxu0
  %217 = vdwg.mxu0
  %v218 = vsel %vm120, %v188, 0.0
  %v219 = vsel %vm121, %v191, 0.0
  %v220 = vsel %vm122, %v196, 0.0
  %v221 = vsel %vm123, %v199, 0.0
  %v222 = vsel %vm124, %v204, 0.0
  %v223 = vsel %vm125, %v207, 0.0
  %v224 = vsel %vm126, %v212, 0.0
  %v225 = vsel %vm127, %v215, 0.0
  %v226 = vpack.c.bf16 %v219, %v218
  %v227 = vpack.c.bf16 %v221, %v220
  %v228 = vpack.c.bf16 %v223, %v222
  %v229 = vpack.c.bf16 %v225, %v224
  %v230 = vpack.c.bf16 %v46, %v45
  %v231 = vpack.c.bf16 %v48, %v47
  %v232 = vpack.c.bf16 %v50, %v49
  %v233 = vpack.c.bf16 %v52, %v51
  %v235 = vsel %vm140, %v226, 0
  %v238 = vsel %vm140, %v227, 0
  %v241 = vsel %vm140, %v228, 0
  %v244 = vsel %vm140, %v229, 0
  %246 = vmatprep.subr.bf16.mxu0 0
  %247 = vmatpush1.bf16.msra.mxu0 0
  %248 = vmatprep.subr.bf16.mxu0 0
  %249 = vmatpush1.bf16.msra.mxu0 0
  %250 = vmatprep.subr.bf16.mxu0 0
  %251 = vmatpush1.bf16.msra.mxu0 0
  %252 = vmatprep.subr.bf16.mxu0 0
  %253 = vmatpush1.bf16.msra.mxu0 0
  %254 = vmatprep.subr.bf16.mxu0 0
  %255 = vmatpush1.bf16.msra.mxu0 %v233
  %256 = vmatprep.subr.bf16.mxu0 0
  %257 = vmatpush1.bf16.msra.mxu0 %v232
  %258 = vmatprep.subr.bf16.mxu0 0
  %259 = vmatpush1.bf16.msra.mxu0 %v231
  %260 = vmatprep.subr.bf16.mxu0 0
  %261 = vmatpush1.bf16.msra.mxu0 %v230
  %262 = vmatprep.subr.bf16.mxu0 0
  %263 = vmatpush2.bf16.msra.mxu0 0
  %264 = vmatprep.subr.bf16.mxu0 0
  %265 = vmatpush2.bf16.msra.mxu0 0
  %266 = vmatprep.subr.bf16.mxu0 0
  %267 = vmatpush2.bf16.msra.mxu0 0
  %268 = vmatprep.subr.bf16.mxu0 0
  %269 = vmatpush2.bf16.msra.mxu0 0
  %270 = vmatprep.subr.bf16.mxu0 0
  %271 = vmatpush2.bf16.msra.mxu0 0
  %272 = vmatprep.subr.bf16.mxu0 0
  %273 = vmatpush2.bf16.msra.mxu0 0
  %274 = vmatprep.subr.bf16.mxu0 0
  %275 = vmatpush2.bf16.msra.mxu0 0
  %276 = vmatprep.subr.bf16.mxu0 0
  %277 = vmatpush2.bf16.msra.mxu0 0
  %278 = vmatprep.mubr.bf16.mxu0 0
  %279 = vmatmul.mubr.bf16.gmra.mxu0 %v235
  %v280 = vpop.f32.mrf.mxu0
  %v281 = vadd.f32 0.0, %v280
  %v282 = vpop.f32.mrf.mxu0
  %v283 = vpop.f32.mrf.mxu0
  %v284 = vadd.f32 0.0, %v283
  %v285 = vpop.f32.mrf.mxu0
  %286 = vmatprep.mubr.bf16.mxu0 0
  %287 = vmatmul.mubr.bf16.gmra.mxu0 %v238
  %v288 = vpop.f32.mrf.mxu0
  %v289 = vadd.f32 0.0, %v288
  %v290 = vpop.f32.mrf.mxu0
  %v291 = vpop.f32.mrf.mxu0
  %v292 = vadd.f32 0.0, %v291
  %v293 = vpop.f32.mrf.mxu0
  %294 = vmatprep.mubr.bf16.mxu0 0
  %295 = vmatmul.mubr.bf16.gmra.mxu0 %v241
  %v296 = vpop.f32.mrf.mxu0
  %v297 = vadd.f32 0.0, %v296
  %v298 = vpop.f32.mrf.mxu0
  %v299 = vpop.f32.mrf.mxu0
  %v300 = vadd.f32 0.0, %v299
  %v301 = vpop.f32.mrf.mxu0
  %302 = vmatprep.mubr.bf16.mxu0 0
  %303 = vmatmul.mubr.bf16.gmra.mxu0 %v244
  %v304 = vpop.f32.mrf.mxu0
  %v305 = vadd.f32 0.0, %v304
  %v306 = vpop.f32.mrf.mxu0
  %v307 = vpop.f32.mrf.mxu0
  %v308 = vadd.f32 0.0, %v307
  %v309 = vpop.f32.mrf.mxu0
  %310 = vdwg.mxu0
  %v311 = vpack.c.bf16 %v38, %v37
  %v312 = vpack.c.bf16 %v40, %v39
  %v313 = vpack.c.bf16 %v42, %v41
  %v314 = vpack.c.bf16 %v44, %v43
  %v315 = vpack.c.bf16 %v284, %v281
  %v316 = vpack.c.bf16 %v292, %v289
  %v317 = vpack.c.bf16 %v300, %v297
  %v318 = vpack.c.bf16 %v308, %v305
  %v319 = vlaneseq
  %v320 = vshrl.u32 %v319, 7
  %v321 = vsub.s32 0, %v320
  %v322 = vrot.slane %v62, %v321
  %v324 = vsel %vm140, %v311, 0
  %v327 = vsel %vm140, %v312, 0
  %v330 = vsel %vm140, %v313, 0
  %v333 = vsel %vm140, %v314, 0
  %335 = vmatprep.subr.bf16.mxu0 0
  %336 = vmatpush1.bf16.msra.mxu0 0
  %337 = vmatprep.subr.bf16.mxu0 0
  %338 = vmatpush1.bf16.msra.mxu0 0
  %339 = vmatprep.subr.bf16.mxu0 0
  %340 = vmatpush1.bf16.msra.mxu0 0
  %341 = vmatprep.subr.bf16.mxu0 0
  %342 = vmatpush1.bf16.msra.mxu0 0
  %343 = vmatprep.subr.bf16.mxu0 0
  %344 = vmatpush1.bf16.msra.mxu0 %v318
  %345 = vmatprep.subr.bf16.mxu0 0
  %346 = vmatpush1.bf16.msra.mxu0 %v317
  %347 = vmatprep.subr.bf16.mxu0 0
  %348 = vmatpush1.bf16.msra.mxu0 %v316
  %349 = vmatprep.subr.bf16.mxu0 0
  %350 = vmatpush1.bf16.msra.mxu0 %v315
  %351 = vmatprep.subr.bf16.mxu0 0
  %352 = vmatpush2.bf16.msra.mxu0 0
  %353 = vmatprep.subr.bf16.mxu0 0
  %354 = vmatpush2.bf16.msra.mxu0 0
  %355 = vmatprep.subr.bf16.mxu0 0
  %356 = vmatpush2.bf16.msra.mxu0 0
  %357 = vmatprep.subr.bf16.mxu0 0
  %358 = vmatpush2.bf16.msra.mxu0 0
  %359 = vmatprep.subr.bf16.mxu0 0
  %360 = vmatpush2.bf16.msra.mxu0 0
  %361 = vmatprep.subr.bf16.mxu0 0
  %362 = vmatpush2.bf16.msra.mxu0 0
  %363 = vmatprep.subr.bf16.mxu0 0
  %364 = vmatpush2.bf16.msra.mxu0 0
  %365 = vmatprep.subr.bf16.mxu0 0
  %366 = vmatpush2.bf16.msra.mxu0 0
  %367 = vmatprep.mubr.bf16.mxu0 0
  %368 = vmatmul.mubr.bf16.gmra.mxu0 %v324
  %v369 = vpop.f32.mrf.mxu0
  %v370 = vadd.f32 %v322, %v369
  %v371 = vpop.f32.mrf.mxu0
  %v372 = vpop.f32.mrf.mxu0
  %v373 = vadd.f32 %v322, %v372
  %v374 = vpop.f32.mrf.mxu0
  %375 = vmatprep.mubr.bf16.mxu0 0
  %376 = vmatmul.mubr.bf16.gmra.mxu0 %v327
  %v377 = vpop.f32.mrf.mxu0
  %v378 = vadd.f32 %v322, %v377
  %v379 = vpop.f32.mrf.mxu0
  %v380 = vpop.f32.mrf.mxu0
  %v381 = vadd.f32 %v322, %v380
  %v382 = vpop.f32.mrf.mxu0
  %383 = vmatprep.mubr.bf16.mxu0 0
  %384 = vmatmul.mubr.bf16.gmra.mxu0 %v330
  %v385 = vpop.f32.mrf.mxu0
  %v386 = vadd.f32 %v322, %v385
  %v387 = vpop.f32.mrf.mxu0
  %v388 = vpop.f32.mrf.mxu0
  %v389 = vadd.f32 %v322, %v388
  %v390 = vpop.f32.mrf.mxu0
  %391 = vmatprep.mubr.bf16.mxu0 0
  %392 = vmatmul.mubr.bf16.gmra.mxu0 %v333
  %v393 = vpop.f32.mrf.mxu0
  %v394 = vadd.f32 %v322, %v393
  %v395 = vpop.f32.mrf.mxu0
  %v396 = vpop.f32.mrf.mxu0
  %v397 = vadd.f32 %v322, %v396
  %v398 = vpop.f32.mrf.mxu0
  %399 = vdwg.mxu0
  %v400 = vsel %vm120, %v370, 0.0
  %v401 = vsel %vm121, %v373, 0.0
  %v402 = vsel %vm122, %v378, 0.0
  %v403 = vsel %vm123, %v381, 0.0
  %v404 = vsel %vm124, %v386, 0.0
  %v405 = vsel %vm125, %v389, 0.0
  %v406 = vsel %vm126, %v394, 0.0
  %v407 = vsel %vm127, %v397, 0.0
  %v408 = vmax.f32 %v400, 0.0
  %v409 = vmax.f32 %v401, 0.0
  %v410 = vmax.f32 %v402, 0.0
  %v411 = vmax.f32 %v403, 0.0
  %v412 = vmax.f32 %v404, 0.0
  %v413 = vmax.f32 %v405, 0.0
  %v414 = vmax.f32 %v406, 0.0
  %v415 = vmax.f32 %v407, 0.0
  %v416 = vpack.c.bf16 %v409, %v408
  %v417 = vpack.c.bf16 %v411, %v410
  %v418 = vpack.c.bf16 %v413, %v412
  %v419 = vpack.c.bf16 %v415, %v414
  %v420 = vpack.c.bf16 %v54, %v53
  %v421 = vpack.c.bf16 %v56, %v55
  %v422 = vpack.c.bf16 %v58, %v57
  %v423 = vpack.c.bf16 %v60, %v59
  %v425 = vsel %vm140, %v416, 0
  %v428 = vsel %vm140, %v417, 0
  %v431 = vsel %vm140, %v418, 0
  %v434 = vsel %vm140, %v419, 0
  %436 = vmatprep.subr.bf16.mxu0 0
  %437 = vmatpush1.bf16.msra.mxu0 0
  %438 = vmatprep.subr.bf16.mxu0 0
  %439 = vmatpush1.bf16.msra.mxu0 0
  %440 = vmatprep.subr.bf16.mxu0 0
  %441 = vmatpush1.bf16.msra.mxu0 0
  %442 = vmatprep.subr.bf16.mxu0 0
  %443 = vmatpush1.bf16.msra.mxu0 0
  %444 = vmatprep.subr.bf16.mxu0 0
  %445 = vmatpush1.bf16.msra.mxu0 %v423
  %446 = vmatprep.subr.bf16.mxu0 0
  %447 = vmatpush1.bf16.msra.mxu0 %v422
  %448 = vmatprep.subr.bf16.mxu0 0
  %449 = vmatpush1.bf16.msra.mxu0 %v421
  %450 = vmatprep.subr.bf16.mxu0 0
  %451 = vmatpush1.bf16.msra.mxu0 %v420
  %452 = vmatprep.subr.bf16.mxu0 0
  %453 = vmatpush2.bf16.msra.mxu0 0
  %454 = vmatprep.subr.bf16.mxu0 0
  %455 = vmatpush2.bf16.msra.mxu0 0
  %456 = vmatprep.subr.bf16.mxu0 0
  %457 = vmatpush2.bf16.msra.mxu0 0
  %458 = vmatprep.subr.bf16.mxu0 0
  %459 = vmatpush2.bf16.msra.mxu0 0
  %460 = vmatprep.subr.bf16.mxu0 0
  %461 = vmatpush2.bf16.msra.mxu0 0
  %462 = vmatprep.subr.bf16.mxu0 0
  %463 = vmatpush2.bf16.msra.mxu0 0
  %464 = vmatprep.subr.bf16.mxu0 0
  %465 = vmatpush2.bf16.msra.mxu0 0
  %466 = vmatprep.subr.bf16.mxu0 0
  %467 = vmatpush2.bf16.msra.mxu0 0
  %468 = vmatprep.mubr.bf16.mxu0 0
  %469 = vmatmul.mubr.bf16.gmra.mxu0 %v425
  %v470 = vpop.f32.mrf.mxu0
  %v471 = vadd.f32 0.0, %v470
  %v472 = vpop.f32.mrf.mxu0
  %v473 = vpop.f32.mrf.mxu0
  %v474 = vadd.f32 0.0, %v473
  %v475 = vpop.f32.mrf.mxu0
  %476 = vmatprep.mubr.bf16.mxu0 0
  %477 = vmatmul.mubr.bf16.gmra.mxu0 %v428
  %v478 = vpop.f32.mrf.mxu0
  %v479 = vadd.f32 0.0, %v478
  %v480 = vpop.f32.mrf.mxu0
  %v481 = vpop.f32.mrf.mxu0
  %v482 = vadd.f32 0.0, %v481
  %v483 = vpop.f32.mrf.mxu0
  %484 = vmatprep.mubr.bf16.mxu0 0
  %485 = vmatmul.mubr.bf16.gmra.mxu0 %v431
  %v486 = vpop.f32.mrf.mxu0
  %v487 = vadd.f32 0.0, %v486
  %v488 = vpop.f32.mrf.mxu0
  %v489 = vpop.f32.mrf.mxu0
  %v490 = vadd.f32 0.0, %v489
  %v491 = vpop.f32.mrf.mxu0
  %492 = vmatprep.mubr.bf16.mxu0 0
  %493 = vmatmul.mubr.bf16.gmra.mxu0 %v434
  %v494 = vpop.f32.mrf.mxu0
  %v495 = vadd.f32 0.0, %v494
  %v496 = vpop.f32.mrf.mxu0
  %v497 = vpop.f32.mrf.mxu0
  %v498 = vadd.f32 0.0, %v497
  %v499 = vpop.f32.mrf.mxu0
  %500 = vdwg.mxu0
  %v501 = vpack.c.bf16 %v474, %v471
  %v502 = vpack.c.bf16 %v482, %v479
  %v503 = vpack.c.bf16 %v490, %v487
  %v504 = vpack.c.bf16 %v498, %v495
  %v505 = vlaneseq
  %v506 = vshrl.u32 %v505, 7
  %v507 = vsub.s32 0, %v506
  %v508 = vrot.slane %v63, %v507
  %509 = vmatprep.subr.bf16.mxu0 0
  %510 = vmatpush1.bf16.msra.mxu0 0
  %511 = vmatprep.subr.bf16.mxu0 0
  %512 = vmatpush1.bf16.msra.mxu0 0
  %513 = vmatprep.subr.bf16.mxu0 0
  %514 = vmatpush1.bf16.msra.mxu0 0
  %515 = vmatprep.subr.bf16.mxu0 0
  %516 = vmatpush1.bf16.msra.mxu0 0
  %517 = vmatprep.subr.bf16.mxu0 0
  %518 = vmatpush1.bf16.msra.mxu0 %v504
  %519 = vmatprep.subr.bf16.mxu0 0
  %520 = vmatpush1.bf16.msra.mxu0 %v503
  %521 = vmatprep.subr.bf16.mxu0 0
  %522 = vmatpush1.bf16.msra.mxu0 %v502
  %523 = vmatprep.subr.bf16.mxu0 0
  %524 = vmatpush1.bf16.msra.mxu0 %v501
  %525 = vmatprep.subr.bf16.mxu0 0
  %526 = vmatpush2.bf16.msra.mxu0 0
  %527 = vmatprep.subr.bf16.mxu0 0
  %528 = vmatpush2.bf16.msra.mxu0 0
  %529 = vmatprep.subr.bf16.mxu0 0
  %530 = vmatpush2.bf16.msra.mxu0 0
  %531 = vmatprep.subr.bf16.mxu0 0
  %532 = vmatpush2.bf16.msra.mxu0 0
  %533 = vmatprep.subr.bf16.mxu0 0
  %534 = vmatpush2.bf16.msra.mxu0 0
  %535 = vmatprep.subr.bf16.mxu0 0
  %536 = vmatpush2.bf16.msra.mxu0 0
  %537 = vmatprep.subr.bf16.mxu0 0
  %538 = vmatpush2.bf16.msra.mxu0 0
  %539 = vmatprep.subr.bf16.mxu0 0
  %540 = vmatpush2.bf16.msra.mxu0 0
  %541 = vmatprep.mubr.bf16.mxu0 0
  %542 = vmatmul.mubr.bf16.gmra.mxu0 %v324
  %v543 = vpop.f32.mrf.mxu0
  %v544 = vadd.f32 %v508, %v543
  %v545 = vpop.f32.mrf.mxu0
  %v546 = vpop.f32.mrf.mxu0
  %v547 = vadd.f32 %v508, %v546
  %v548 = vpop.f32.mrf.mxu0
  %549 = vmatprep.mubr.bf16.mxu0 0
  %550 = vmatmul.mubr.bf16.gmra.mxu0 %v327
  %v551 = vpop.f32.mrf.mxu0
  %v552 = vadd.f32 %v508, %v551
  %v553 = vpop.f32.mrf.mxu0
  %v554 = vpop.f32.mrf.mxu0
  %v555 = vadd.f32 %v508, %v554
  %v556 = vpop.f32.mrf.mxu0
  %557 = vmatprep.mubr.bf16.mxu0 0
  %558 = vmatmul.mubr.bf16.gmra.mxu0 %v330
  %v559 = vpop.f32.mrf.mxu0
  %v560 = vadd.f32 %v508, %v559
  %v561 = vpop.f32.mrf.mxu0
  %v562 = vpop.f32.mrf.mxu0
  %v563 = vadd.f32 %v508, %v562
  %v564 = vpop.f32.mrf.mxu0
  %565 = vmatprep.mubr.bf16.mxu0 0
  %566 = vmatmul.mubr.bf16.gmra.mxu0 %v333
  %v567 = vpop.f32.mrf.mxu0
  %v568 = vadd.f32 %v508, %v567
  %v569 = vpop.f32.mrf.mxu0
  %v570 = vpop.f32.mrf.mxu0
  %v571 = vadd.f32 %v508, %v570
  %v572 = vpop.f32.mrf.mxu0
  %573 = vdwg.mxu0
  %v574 = vld [vmem:[%s3] sm:$0xff]
  %v575 = vld [vmem:[%s3 + $0x8] sm:$0xff]
  %v576 = vld [vmem:[%s3 + $0x10] sm:$0xff]
  %v577 = vld [vmem:[%s3 + $0x18] sm:$0xff]
  %v578 = vld [vmem:[%s3 + $0x20] sm:$0xff]
  %v579 = vld [vmem:[%s3 + $0x28] sm:$0xff]
  %v580 = vld [vmem:[%s3 + $0x30] sm:$0xff]
  %581 = vset.pattern.permute.xlu0 0
  %582 = vperm.xlu0 %581, %v574
  %v583 = vpop.permute.xlu0 %582
  %584 = vset.pattern.permute.xlu0 0
  %585 = vperm.xlu0 %584, %v575
  %v586 = vpop.permute.xlu0 %585
  %587 = vset.pattern.permute.xlu0 0
  %588 = vperm.xlu0 %587, %v576
  %v589 = vpop.permute.xlu0 %588
  %590 = vset.pattern.permute.xlu0 0
  %591 = vperm.xlu0 %590, %v577
  %v592 = vpop.permute.xlu0 %591
  %593 = vset.pattern.permute.xlu0 0
  %594 = vperm.xlu0 %593, %v578
  %v595 = vpop.permute.xlu0 %594
  %596 = vset.pattern.permute.xlu0 0
  %597 = vperm.xlu0 %596, %v579
  %v598 = vpop.permute.xlu0 %597
  %599 = vset.pattern.permute.xlu0 0
  %600 = vperm.xlu0 %599, %v580
  %v601 = vpop.permute.xlu0 %600
  %vm602 = vcmp.eq.s32.totalorder %v102, %v583
  %vm603 = vcmp.eq.s32.totalorder %v102, %v586
  %vm604 = vcmp.eq.s32.totalorder %v102, %v589
  %vm605 = vcmp.eq.s32.totalorder %v102, %v592
  %vm606 = vcmp.eq.s32.totalorder %v102, %v595
  %vm607 = vcmp.eq.s32.totalorder %v102, %v598
  %vm608 = vcmp.eq.s32.totalorder %v102, %v601
  %v609 = vsel %vm602, 1, 0
  %v610 = vsel %vm603, 1, 0
  %v611 = vsel %vm604, 1, 0
  %v612 = vsel %vm605, 1, 0
  %v613 = vsel %vm606, 1, 0
  %v614 = vsel %vm607, 1, 0
  %v615 = vsel %vm608, 1, 0
  %v616 = vcvt.s32.f32 %v609
  %v617 = vcvt.s32.f32 %v610
  %v618 = vcvt.s32.f32 %v611
  %v619 = vcvt.s32.f32 %v612
  %v620 = vcvt.s32.f32 %v613
  %v621 = vcvt.s32.f32 %v614
  %v622 = vcvt.s32.f32 %v615
  %v623 = vpack.c.bf16 %v617, %v616
  %v624 = vpack.c.bf16 %v619, %v618
  %v625 = vpack.c.bf16 %v621, %v620
  %v626 = vpack.c.bf16 %v622, %v622
  %v627 = vpack.c.bf16 %v547, %v544
  %v628 = vpack.c.bf16 %v555, %v552
  %v629 = vpack.c.bf16 %v563, %v560
  %v630 = vpack.c.bf16 %v571, %v568
  %v632 = vsel %vm140, %v623, 0
  %v635 = vsel %vm140, %v624, 0
  %v638 = vsel %vm140, %v625, 0
  %v641 = vsel %vm140, %v626, 0
  %643 = vmatprep.subr.bf16.mxu0 0
  %644 = vmatpush1.bf16.msra.mxu0 0
  %645 = vmatprep.subr.bf16.mxu0 0
  %646 = vmatpush1.bf16.msra.mxu0 0
  %647 = vmatprep.subr.bf16.mxu0 0
  %648 = vmatpush1.bf16.msra.mxu0 0
  %649 = vmatprep.subr.bf16.mxu0 0
  %650 = vmatpush1.bf16.msra.mxu0 0
  %651 = vmatprep.subr.bf16.mxu0 0
  %652 = vmatpush1.bf16.msra.mxu0 %v630
  %653 = vmatprep.subr.bf16.mxu0 0
  %654 = vmatpush1.bf16.msra.mxu0 %v629
  %655 = vmatprep.subr.bf16.mxu0 0
  %656 = vmatpush1.bf16.msra.mxu0 %v628
  %657 = vmatprep.subr.bf16.mxu0 0
  %658 = vmatpush1.bf16.msra.mxu0 %v627
  %659 = vmatprep.subr.bf16.mxu0 0
  %660 = vmatpush2.bf16.msra.mxu0 0
  %661 = vmatprep.subr.bf16.mxu0 0
  %662 = vmatpush2.bf16.msra.mxu0 0
  %663 = vmatprep.subr.bf16.mxu0 0
  %664 = vmatpush2.bf16.msra.mxu0 0
  %665 = vmatprep.subr.bf16.mxu0 0
  %666 = vmatpush2.bf16.msra.mxu0 0
  %667 = vmatprep.subr.bf16.mxu0 0
  %668 = vmatpush2.bf16.msra.mxu0 0
  %669 = vmatprep.subr.bf16.mxu0 0
  %670 = vmatpush2.bf16.msra.mxu0 0
  %671 = vmatprep.subr.bf16.mxu0 0
  %672 = vmatpush2.bf16.msra.mxu0 0
  %673 = vmatprep.subr.bf16.mxu0 0
  %674 = vmatpush2.bf16.msra.mxu0 0
  %675 = vmatprep.mubr.bf16.mxu0 0
  %676 = vmatmul.mubr.bf16.gmra.mxu0 %v632
  %v677 = vpop.f32.mrf.mxu0
  %v678 = vadd.f32 0.0, %v677
  %v679 = vpop.f32.mrf.mxu0
  %v680 = vpop.f32.mrf.mxu0
  %v681 = vadd.f32 0.0, %v680
  %v682 = vpop.f32.mrf.mxu0
  %683 = vmatprep.mubr.bf16.mxu0 0
  %684 = vmatmul.mubr.bf16.gmra.mxu0 %v635
  %v685 = vpop.f32.mrf.mxu0
  %v686 = vadd.f32 0.0, %v685
  %v687 = vpop.f32.mrf.mxu0
  %v688 = vpop.f32.mrf.mxu0
  %v689 = vadd.f32 0.0, %v688
  %v690 = vpop.f32.mrf.mxu0
  %691 = vmatprep.mubr.bf16.mxu0 0
  %692 = vmatmul.mubr.bf16.gmra.mxu0 %v638
  %v693 = vpop.f32.mrf.mxu0
  %v694 = vadd.f32 0.0, %v693
  %v695 = vpop.f32.mrf.mxu0
  %v696 = vpop.f32.mrf.mxu0
  %v697 = vadd.f32 0.0, %v696
  %v698 = vpop.f32.mrf.mxu0
  %699 = vmatprep.mubr.bf16.mxu0 0
  %700 = vmatmul.mubr.bf16.gmra.mxu0 %v641
  %v701 = vpop.f32.mrf.mxu0
  %v702 = vadd.f32 0.0, %v701
  %v703 = vpop.f32.mrf.mxu0
  %v704 = vpop.f32.mrf.mxu0
  %v705 = vpop.f32.mrf.mxu0
  %706 = vdwg.mxu0
  %v707 = vpack.c.bf16 %v678, %v678
  %v708 = vpack.c.bf16 %v686, %v681
  %v709 = vpack.c.bf16 %v694, %v689
  %v710 = vpack.c.bf16 %v702, %v697
  %714 = vrot.lane.b32.xlu0 %v708, 96
  %v715 = vpop.permute.xlu0 %714
  %716 = vrot.lane.b32.xlu0 %v709, 96
  %v717 = vpop.permute.xlu0 %716
  %718 = vrot.lane.b32.xlu0 %v710, 96
  %v719 = vpop.permute.xlu0 %718
  %vm720 = vcmask 261120
  %v722 = vsel %vm720, %v707, 0
  %v725 = vsel %vm720, %v715, 0
  %v728 = vsel %vm720, %v717, 0
  %v731 = vsel %vm720, %v719, 0
  %733 = vmatprep.subr.bf16.mxu0 0
  %734 = vmatpush1.bf16.xpose.msra.mxu0 0
  %735 = vmatprep.subr.bf16.mxu0 0
  %736 = vmatpush1.bf16.xpose.msra.mxu0 0
  %737 = vmatprep.subr.bf16.mxu0 0
  %738 = vmatpush1.bf16.xpose.msra.mxu0 0
  %739 = vmatprep.subr.bf16.mxu0 0
  %740 = vmatpush1.bf16.xpose.msra.mxu0 0
  %741 = vmatprep.subr.bf16.mxu0 0
  %742 = vmatpush1.bf16.xpose.msra.mxu0 0
  %743 = vmatprep.subr.bf16.mxu0 0
  %744 = vmatpush1.bf16.xpose.msra.mxu0 %v731
  %745 = vmatprep.subr.bf16.mxu0 0
  %746 = vmatpush1.bf16.xpose.msra.mxu0 %v728
  %747 = vmatprep.subr.bf16.mxu0 0
  %748 = vmatpush1.bf16.xpose.msra.mxu0 %v725
  %749 = vmatprep.subr.bf16.mxu0 0
  %750 = vmatpush2.bf16.xpose.msra.mxu0 0
  %751 = vmatprep.subr.bf16.mxu0 0
  %752 = vmatpush2.bf16.xpose.msra.mxu0 0
  %753 = vmatprep.subr.bf16.mxu0 0
  %754 = vmatpush2.bf16.xpose.msra.mxu0 0
  %755 = vmatprep.subr.bf16.mxu0 0
  %756 = vmatpush2.bf16.xpose.msra.mxu0 0
  %757 = vmatprep.subr.bf16.mxu0 0
  %758 = vmatpush2.bf16.xpose.msra.mxu0 0
  %759 = vmatprep.subr.bf16.mxu0 0
  %760 = vmatpush2.bf16.xpose.msra.mxu0 0
  %761 = vmatprep.subr.bf16.mxu0 0
  %762 = vmatpush2.bf16.xpose.msra.mxu0 0
  %763 = vmatprep.subr.bf16.mxu0 0
  %764 = vmatpush2.bf16.xpose.msra.mxu0 0
  %765 = vmatprep.mubr.bf16.mxu0 0
  %766 = vmatmul.mubr.bf16.gmra.mxu0 %v722
  %v767 = vpop.f32.mrf.mxu0
  %v768 = vadd.f32 0.0, %v767
  %v769 = vpop.f32.mrf.mxu0
  %v770 = vpop.f32.mrf.mxu0
  %v771 = vpop.f32.mrf.mxu0
  %772 = vdwg.mxu0
  %v773 = vmul.f32 %v768, 0.17677669
  %v774 = vmul.u32 %v93, 6
  %vm775 = vcmp.ge.s32.totalorder %v102, %v774
  %v776 = vadd.s32 %v93, 1
  %v777 = vmul.u32 %v776, 6
  %vm778 = vcmp.lt.s32.totalorder %v102, %v777
  %vm779 = vmand %vm775, %vm778
  %v780 = vsel %vm779, %v773, -1e+30
  %vm781 = vcmask 392192
  %v782 = vsel %vm781, %v780, -inf
  %783 = vmax.xlane.f32.xlu0 %v782
  %v784 = vpop.xlane.xlu0 %783
  %v785 = vsub.f32 %v773, %v784
  %v786 = vmul.f32 %v785, 1.442695
  %v787 = vpow.pop %v786
  %v788 = vsel %vm779, %v787, 0.0
  %v789 = vsel %vm781, %v788, 0.0
  %790 = vadd.xlane.f32.xlu0 %v789
  %v791 = vpop.xlane.xlu0 %790
  %v792 = vrcp.pop %v791
  %v793 = vmul.f32 %v788, %v792
  %v794 = vpack.c.bf16 %v793, %v793
  %v799 = vsel %vm781, %v794, 0
  %801 = vmatprep.subr.bf16.mxu0 0
  %802 = vmatpush1.bf16.msra.mxu0 0
  %803 = vmatprep.subr.bf16.mxu0 0
  %804 = vmatpush1.bf16.msra.mxu0 0
  %805 = vmatprep.subr.bf16.mxu0 0
  %806 = vmatpush1.bf16.msra.mxu0 0
  %807 = vmatprep.subr.bf16.mxu0 0
  %808 = vmatpush1.bf16.msra.mxu0 0
  %809 = vmatprep.subr.bf16.mxu0 0
  %810 = vmatpush1.bf16.msra.mxu0 0
  %811 = vmatprep.subr.bf16.mxu0 0
  %812 = vmatpush1.bf16.msra.mxu0 %v719
  %813 = vmatprep.subr.bf16.mxu0 0
  %814 = vmatpush1.bf16.msra.mxu0 %v717
  %815 = vmatprep.subr.bf16.mxu0 0
  %816 = vmatpush1.bf16.msra.mxu0 %v715
  %817 = vmatprep.subr.bf16.mxu0 0
  %818 = vmatpush2.bf16.msra.mxu0 0
  %819 = vmatprep.subr.bf16.mxu0 0
  %820 = vmatpush2.bf16.msra.mxu0 0
  %821 = vmatprep.subr.bf16.mxu0 0
  %822 = vmatpush2.bf16.msra.mxu0 0
  %823 = vmatprep.subr.bf16.mxu0 0
  %824 = vmatpush2.bf16.msra.mxu0 0
  %825 = vmatprep.subr.bf16.mxu0 0
  %826 = vmatpush2.bf16.msra.mxu0 0
  %827 = vmatprep.subr.bf16.mxu0 0
  %828 = vmatpush2.bf16.msra.mxu0 0
  %829 = vmatprep.subr.bf16.mxu0 0
  %830 = vmatpush2.bf16.msra.mxu0 0
  %831 = vmatprep.subr.bf16.mxu0 0
  %832 = vmatpush2.bf16.msra.mxu0 0
  %833 = vmatprep.mubr.bf16.mxu0 0
  %834 = vmatmul.mubr.bf16.gmra.mxu0 %v799
  %v835 = vpop.f32.mrf.mxu0
  %v836 = vadd.f32 0.0, %v835
  %v837 = vpop.f32.mrf.mxu0
  %v838 = vpop.f32.mrf.mxu0
  %v839 = vpop.f32.mrf.mxu0
  %840 = vdwg.mxu0
  %v841 = vld [vmem:[%s4] sm:$0xff]
  %843 = vset.pattern.permute.xlu0 0
  %844 = vperm.xlu0 %843, %v841
  %v845 = vpop.permute.xlu0 %844
  %v847 = vlaneseq
  %v848 = vshrl.u32 %v847, 7
  %v849 = vsub.s32 0, %v848
  %v850 = vrot.slane %v67, %v849
  %v851 = vmul.f32 %v845, %v850
  %v852 = vlaneseq
  %v853 = vshrl.u32 %v852, 7
  %v854 = vsub.s32 0, %v853
  %v855 = vrot.slane %v65, %v854
  %v856 = vadd.f32 %v851, %v855
  %v857 = vmax.f32 %v856, 0.0
  %v858 = vpack.c.bf16 %v857, %v857
  %v859 = vpack.c.bf16 %v85, %v84
  %v860 = vpack.c.bf16 %v87, %v86
  %862 = vrot.lane.b32.xlu0 %v855, 96
  %v863 = vpop.permute.xlu0 %862
  %v866 = vsel %vm720, %v858, 0
  %868 = vmatprep.subr.bf16.mxu0 0
  %869 = vmatpush1.bf16.msra.mxu0 0
  %870 = vmatprep.subr.bf16.mxu0 0
  %871 = vmatpush1.bf16.msra.mxu0 0
  %872 = vmatprep.subr.bf16.mxu0 0
  %873 = vmatpush1.bf16.msra.mxu0 0
  %874 = vmatprep.subr.bf16.mxu0 0
  %875 = vmatpush1.bf16.msra.mxu0 0
  %876 = vmatprep.subr.bf16.mxu0 0
  %877 = vmatpush1.bf16.msra.mxu0 0
  %878 = vmatprep.subr.bf16.mxu0 0
  %879 = vmatpush1.bf16.msra.mxu0 0
  %880 = vmatprep.subr.bf16.mxu0 0
  %881 = vmatpush1.bf16.msra.mxu0 %v860
  %882 = vmatprep.subr.bf16.mxu0 0
  %883 = vmatpush1.bf16.msra.mxu0 %v859
  %884 = vmatprep.subr.bf16.mxu0 0
  %885 = vmatpush2.bf16.msra.mxu0 0
  %886 = vmatprep.subr.bf16.mxu0 0
  %887 = vmatpush2.bf16.msra.mxu0 0
  %888 = vmatprep.subr.bf16.mxu0 0
  %889 = vmatpush2.bf16.msra.mxu0 0
  %890 = vmatprep.subr.bf16.mxu0 0
  %891 = vmatpush2.bf16.msra.mxu0 0
  %892 = vmatprep.subr.bf16.mxu0 0
  %893 = vmatpush2.bf16.msra.mxu0 0
  %894 = vmatprep.subr.bf16.mxu0 0
  %895 = vmatpush2.bf16.msra.mxu0 0
  %896 = vmatprep.subr.bf16.mxu0 0
  %897 = vmatpush2.bf16.msra.mxu0 0
  %898 = vmatprep.subr.bf16.mxu0 0
  %899 = vmatpush2.bf16.msra.mxu0 0
  %900 = vmatprep.mubr.bf16.mxu0 0
  %901 = vmatmul.mubr.bf16.gmra.mxu0 %v866
  %v902 = vpop.f32.mrf.mxu0
  %v903 = vadd.f32 %v863, %v902
  %v904 = vpop.f32.mrf.mxu0
  %v905 = vpop.f32.mrf.mxu0
  %v906 = vpop.f32.mrf.mxu0
  %907 = vdwg.mxu0
  %v908 = vmax.f32 %v903, 0.0
  %910 = vrot.lane.b32.xlu0 %v836, 32
  %v911 = vpop.permute.xlu0 %910
  %v913 = vsel %vm720, %v678, %v911
  %v914 = vpack.c.bf16 %v913, %v913
  %v915 = vpack.c.bf16 %v69, %v68
  %v916 = vpack.c.bf16 %v71, %v70
  %v917 = vpack.c.bf16 %v73, %v72
  %v918 = vpack.c.bf16 %v75, %v74
  %v919 = vlaneseq
  %v920 = vshrl.u32 %v919, 7
  %v921 = vsub.s32 0, %v920
  %v922 = vrot.slane %v64, %v921
  %v924 = vsel %vm140, %v914, 0
  %926 = vmatprep.subr.bf16.mxu0 0
  %927 = vmatpush1.bf16.msra.mxu0 0
  %928 = vmatprep.subr.bf16.mxu0 0
  %929 = vmatpush1.bf16.msra.mxu0 0
  %930 = vmatprep.subr.bf16.mxu0 0
  %931 = vmatpush1.bf16.msra.mxu0 0
  %932 = vmatprep.subr.bf16.mxu0 0
  %933 = vmatpush1.bf16.msra.mxu0 0
  %934 = vmatprep.subr.bf16.mxu0 0
  %935 = vmatpush1.bf16.msra.mxu0 %v918
  %936 = vmatprep.subr.bf16.mxu0 0
  %937 = vmatpush1.bf16.msra.mxu0 %v917
  %938 = vmatprep.subr.bf16.mxu0 0
  %939 = vmatpush1.bf16.msra.mxu0 %v916
  %940 = vmatprep.subr.bf16.mxu0 0
  %941 = vmatpush1.bf16.msra.mxu0 %v915
  %942 = vmatprep.subr.bf16.mxu0 0
  %943 = vmatpush2.bf16.msra.mxu0 0
  %944 = vmatprep.subr.bf16.mxu0 0
  %945 = vmatpush2.bf16.msra.mxu0 0
  %946 = vmatprep.subr.bf16.mxu0 0
  %947 = vmatpush2.bf16.msra.mxu0 0
  %948 = vmatprep.subr.bf16.mxu0 0
  %949 = vmatpush2.bf16.msra.mxu0 0
  %950 = vmatprep.subr.bf16.mxu0 0
  %951 = vmatpush2.bf16.msra.mxu0 0
  %952 = vmatprep.subr.bf16.mxu0 0
  %953 = vmatpush2.bf16.msra.mxu0 0
  %954 = vmatprep.subr.bf16.mxu0 0
  %955 = vmatpush2.bf16.msra.mxu0 0
  %956 = vmatprep.subr.bf16.mxu0 0
  %957 = vmatpush2.bf16.msra.mxu0 0
  %958 = vmatprep.mubr.bf16.mxu0 0
  %959 = vmatmul.mubr.bf16.gmra.mxu0 %v924
  %v960 = vpop.f32.mrf.mxu0
  %v961 = vadd.f32 %v922, %v960
  %v962 = vpop.f32.mrf.mxu0
  %v963 = vpop.f32.mrf.mxu0
  %v964 = vpop.f32.mrf.mxu0
  %965 = vdwg.mxu0
  %v966 = vmax.f32 %v961, 0.0
  %968 = vrot.lane.b32.xlu0 %v908, 32
  %v969 = vpop.permute.xlu0 %968
  %v971 = vsel %vm720, %v966, %v969
  %v972 = vpack.c.bf16 %v971, %v971
  %v973 = vpack.c.bf16 %v77, %v76
  %v974 = vpack.c.bf16 %v79, %v78
  %v975 = vpack.c.bf16 %v81, %v80
  %v976 = vpack.c.bf16 %v83, %v82
  %978 = vrot.lane.b32.xlu0 %v922, 96
  %v979 = vpop.permute.xlu0 %978
  %v982 = vsel %vm140, %v972, 0
  %984 = vmatprep.subr.bf16.mxu0 0
  %985 = vmatpush1.bf16.msra.mxu0 0
  %986 = vmatprep.subr.bf16.mxu0 0
  %987 = vmatpush1.bf16.msra.mxu0 0
  %988 = vmatprep.subr.bf16.mxu0 0
  %989 = vmatpush1.bf16.msra.mxu0 0
  %990 = vmatprep.subr.bf16.mxu0 0
  %991 = vmatpush1.bf16.msra.mxu0 0
  %992 = vmatprep.subr.bf16.mxu0 0
  %993 = vmatpush1.bf16.msra.mxu0 %v976
  %994 = vmatprep.subr.bf16.mxu0 0
  %995 = vmatpush1.bf16.msra.mxu0 %v975
  %996 = vmatprep.subr.bf16.mxu0 0
  %997 = vmatpush1.bf16.msra.mxu0 %v974
  %998 = vmatprep.subr.bf16.mxu0 0
  %999 = vmatpush1.bf16.msra.mxu0 %v973
  %1000 = vmatprep.subr.bf16.mxu0 0
  %1001 = vmatpush2.bf16.msra.mxu0 0
  %1002 = vmatprep.subr.bf16.mxu0 0
  %1003 = vmatpush2.bf16.msra.mxu0 0
  %1004 = vmatprep.subr.bf16.mxu0 0
  %1005 = vmatpush2.bf16.msra.mxu0 0
  %1006 = vmatprep.subr.bf16.mxu0 0
  %1007 = vmatpush2.bf16.msra.mxu0 0
  %1008 = vmatprep.subr.bf16.mxu0 0
  %1009 = vmatpush2.bf16.msra.mxu0 0
  %1010 = vmatprep.subr.bf16.mxu0 0
  %1011 = vmatpush2.bf16.msra.mxu0 0
  %1012 = vmatprep.subr.bf16.mxu0 0
  %1013 = vmatpush2.bf16.msra.mxu0 0
  %1014 = vmatprep.subr.bf16.mxu0 0
  %1015 = vmatpush2.bf16.msra.mxu0 0
  %1016 = vmatprep.mubr.bf16.mxu0 0
  %1017 = vmatmul.mubr.bf16.gmra.mxu0 %v982
  %v1018 = vpop.f32.mrf.mxu0
  %v1019 = vadd.f32 %v979, %v1018
  %v1020 = vpop.f32.mrf.mxu0
  %v1021 = vpop.f32.mrf.mxu0
  %v1022 = vpop.f32.mrf.mxu0
  %1023 = vdwg.mxu0
  %v1024 = vmax.f32 %v1019, 0.0
  %v1025 = vpack.c.bf16 %v1024, %v1024
  %v1026 = vpack.c.bf16 %v89, %v88
  %v1027 = vpack.c.bf16 %v91, %v90
  %v1028 = vlaneseq
  %v1029 = vshrl.u32 %v1028, 7
  %v1030 = vsub.s32 0, %v1029
  %v1031 = vrot.slane %v66, %v1030
  %v1033 = vsel %vm720, %v1025, 0
  %1035 = vmatprep.subr.bf16.mxu0 0
  %1036 = vmatpush1.bf16.msra.mxu0 0
  %1037 = vmatprep.subr.bf16.mxu0 0
  %1038 = vmatpush1.bf16.msra.mxu0 0
  %1039 = vmatprep.subr.bf16.mxu0 0
  %1040 = vmatpush1.bf16.msra.mxu0 0
  %1041 = vmatprep.subr.bf16.mxu0 0
  %1042 = vmatpush1.bf16.msra.mxu0 0
  %1043 = vmatprep.subr.bf16.mxu0 0
  %1044 = vmatpush1.bf16.msra.mxu0 0
  %1045 = vmatprep.subr.bf16.mxu0 0
  %1046 = vmatpush1.bf16.msra.mxu0 0
  %1047 = vmatprep.subr.bf16.mxu0 0
  %1048 = vmatpush1.bf16.msra.mxu0 %v1027
  %1049 = vmatprep.subr.bf16.mxu0 0
  %1050 = vmatpush1.bf16.msra.mxu0 %v1026
  %1051 = vmatprep.subr.bf16.mxu0 0
  %1052 = vmatpush2.bf16.msra.mxu0 0
  %1053 = vmatprep.subr.bf16.mxu0 0
  %1054 = vmatpush2.bf16.msra.mxu0 0
  %1055 = vmatprep.subr.bf16.mxu0 0
  %1056 = vmatpush2.bf16.msra.mxu0 0
  %1057 = vmatprep.subr.bf16.mxu0 0
  %1058 = vmatpush2.bf16.msra.mxu0 0
  %1059 = vmatprep.subr.bf16.mxu0 0
  %1060 = vmatpush2.bf16.msra.mxu0 0
  %1061 = vmatprep.subr.bf16.mxu0 0
  %1062 = vmatpush2.bf16.msra.mxu0 0
  %1063 = vmatprep.subr.bf16.mxu0 0
  %1064 = vmatpush2.bf16.msra.mxu0 0
  %1065 = vmatprep.subr.bf16.mxu0 0
  %1066 = vmatpush2.bf16.msra.mxu0 0
  %1067 = vmatprep.mubr.bf16.mxu0 0
  %1068 = vmatmul.mubr.bf16.gmra.mxu0 %v1033
  %v1069 = vpop.f32.mrf.mxu0
  %v1070 = vadd.f32 %v1031, %v1069
  %v1071 = vpop.f32.mrf.mxu0
  %v1072 = vpop.f32.mrf.mxu0
  %v1073 = vpop.f32.mrf.mxu0
  %1074 = vdwg.mxu0
  %vm1075 = vcmask 31744
  %v1076 = vsel %vm1075, %v1070, -inf
  %1077 = vmax.xlane.f32.xlu0 %v1076
  %v1078 = vpop.xlane.xlu0 %1077
  %v1079 = vsub.f32 %v1070, %v1078
  %v1080 = vmul.f32 %v1079, 1.442695
  %v1081 = vpow.pop %v1080
  %v1082 = vsel %vm1075, %v1081, 0.0
  %1083 = vadd.xlane.f32.xlu0 %v1082
  %v1084 = vpop.xlane.xlu0 %1083
  %v1085 = vrcp.pop %v1084
  %v1086 = vmul.f32 %v1081, %v1085
  %1087 = vst.msk [vmem:[%s5] sm:$0xff] %vm1075, %v1086
  // Predicated region
  $region22: #{trans_model_forward.1} parent=0 // pred_check
    _
  $region23: #{trans_model_forward.1} parent=0 // pred_check_branch
    %1089 = sbr.rel (0) target = $region25
  $region24: #{trans_model_forward.1} parent=0 // pred_region
    _
  $region25: #{trans_model_forward.1} parent=0 // pred_fallthru
    _
  // Predicated region
  $region26: #{trans_model_forward.1} parent=0 // pred_check
    _
  $region27: #{trans_model_forward.1} parent=0 // pred_check_branch
    %1091 = sbr.rel (0) target = $region29
  $region28: #{trans_model_forward.1} parent=0 // pred_region
    _
  $region29: #{trans_model_forward.1} parent=0 // pred_fallthru
    _

</llo_original>
